<compile_context>
chip_gen: v7x
topology: tpu7x:2x2x1
jax: 0.10.0
libtpu: 0.0.40
codegen_flags: <defaults>
</compile_context>

<pallas_src>
import functools

import jax
import jax.numpy as jnp
from jax import lax
from jax.experimental import pallas as pl
from jax.experimental.pallas import tpu as pltpu

NEG_INF = -1e30  # large finite mask value: avoids (-inf) - (-inf) = NaN paths


# ----------------------------------------------------------------------------
# Fused kernel: QKV projection + causal softmax attention for one q-row tile.
# ----------------------------------------------------------------------------
def fused_head_kernel(x_ref, w_ref, o_ref, *, head_size, tq, scale):
    # x_ref: (T, C)   full sequence of this batch element (resident across qi)
    # w_ref: (C, 3H)  fused [Wq | Wk | Wv] weights (resident across the grid)
    # o_ref: (tq, H)  output rows for this q tile
    qi = pl.program_id(1)
    H = head_size
    T = x_ref.shape[0]

    # bf16 MXU operands, f32 accumulation everywhere.
    w = w_ref[...]
    wq_bf = w[:, :H].astype(jnp.bfloat16)        # (C, H)
    wkv_bf = w[:, H:].astype(jnp.bfloat16)       # (C, 2H)

    # K / V projection for the whole sequence (one wide MXU pass, N = 2H).
    x_bf = x_ref[...].astype(jnp.bfloat16)       # (T, C)
    kv = jnp.dot(x_bf, wkv_bf, preferred_element_type=jnp.float32)  # (T, 2H)
    kv_bf = kv.astype(jnp.bfloat16)
    k_bf = kv_bf[:, :H]                          # (T, H)
    v_bf = kv_bf[:, H:]                          # (T, H)

    # Q projection only for this tile's rows; scale q (tq, H), not the scores.
    row0 = pl.multiple_of(qi * tq, tq)
    xq_bf = x_ref[pl.ds(row0, tq), :].astype(jnp.bfloat16)           # (tq, C)
    q = jnp.dot(xq_bf, wq_bf, preferred_element_type=jnp.float32)    # (tq, H)
    q_bf = (q * jnp.float32(scale)).astype(jnp.bfloat16)

    # Scores: q @ k^T, contracting last dims (no transpose materialized).
    s = lax.dot_general(
        q_bf, k_bf,
        dimension_numbers=(((1,), (1,)), ((), ())),
        preferred_element_type=jnp.float32,
    )                                            # (tq, T)

    # Causal mask (tril): column index must not exceed absolute row index.
    row = row0 + lax.broadcasted_iota(jnp.int32, (tq, T), 0)
    col = lax.broadcasted_iota(jnp.int32, (tq, T), 1)
    s = jnp.where(col <= row, s, NEG_INF)

    # Exact per-row softmax: the whole key row is present, so no online update.
    m = jnp.max(s, axis=-1, keepdims=True)       # (tq, 1)
    p = jnp.exp(s - m)                           # (tq, T), masked entries -> 0
    l = jnp.sum(p, axis=-1, keepdims=True)       # (tq, 1), > 0 (diag unmasked)
    r = pl.reciprocal(l, approx=True)            # EUP vrcp (free slot)
    r = r * (2.0 - l * r)                        # one Newton step -> ~f32 acc.

    out = jnp.dot(p.astype(jnp.bfloat16), v_bf,
                  preferred_element_type=jnp.float32)                # (tq, H)
    o_ref[...] = (out * r).astype(o_ref.dtype)


def head_forward(x, w_qkv, *, tq=128):
    """x: (B, T, C);  w_qkv: (C, 3H) = [Wq | Wk | Wv] pre-transposed."""
    B, T, C = x.shape
    H3 = w_qkv.shape[1]
    assert H3 % 3 == 0
    H = H3 // 3
    assert H % 128 == 0, "head_size must be lane-dense (multiple of 128)"
    tq = min(tq, T)
    assert T % tq == 0, "T must be divisible by the q-row tile"
    scale = float(C) ** -0.5          # module uses C (= n_embed) ** -0.5

    kernel = functools.partial(fused_head_kernel, head_size=H, tq=tq, scale=scale)
    return pl.pallas_call(
        kernel,
        out_shape=jax.ShapeDtypeStruct((B, T, H), x.dtype),
        grid_spec=pltpu.PrefetchScalarGridSpec(
            num_scalar_prefetch=0,
            grid=(B, T // tq),
            in_specs=[
                # Full (T, C) sequence block: same block index for every qi,
                # so it is DMA'd once per batch element.
                pl.BlockSpec((None, T, C), lambda b, qi: (b, 0, 0)),
                # Fused weight: one block for the whole grid (stays resident).
                pl.BlockSpec((C, H3), lambda b, qi: (0, 0)),
            ],
            out_specs=pl.BlockSpec((None, tq, H), lambda b, qi: (b, qi, 0)),
        ),
        compiler_params=pltpu.CompilerParams(
            dimension_semantics=("parallel", "parallel"),
        ),
    )(x, w_qkv)


# ----------------------------------------------------------------------------
# Pure-JAX reference (mirrors the PyTorch forward exactly, f32 throughout)
# ----------------------------------------------------------------------------
def head_reference(x, w_qkv):
    B, T, C = x.shape
    H = w_qkv.shape[1] // 3
    wq, wk, wv = w_qkv[:, :H], w_qkv[:, H:2 * H], w_qkv[:, 2 * H:]
    q = x @ wq
    k = x @ wk
    v = x @ wv
    wei = jnp.einsum("btd,bsd->bts", q, k) * (C ** -0.5)
    mask = jnp.tril(jnp.ones((T, T), dtype=bool))
    wei = jnp.where(mask[None], wei, -jnp.inf)
    wei = jax.nn.softmax(wei, axis=-1)
    return jnp.einsum("bts,bsd->btd", wei, v)


if __name__ == "__main__":
    # Shapes implied by the module: block_size=256 (T), n_embed=384 (C).
    # head_size chosen as 128 so the attention output is lane-dense.
    B, T, C, H = 2, 256, 384, 128

    key = jax.random.PRNGKey(0)
    kx, kq, kk, kv = jax.random.split(key, 4)

    x = jax.random.normal(kx, (B, T, C), dtype=jnp.float32)

    # nn.Linear(n_embed, head_size, bias=False) weights, stored pre-transposed
    # as (C, H) and fused into a single (C, 3H) matrix in [q | k | v] order.
    bound = 1.0 / (C ** 0.5)
    wq = jax.random.uniform(kq, (C, H), jnp.float32, -bound, bound)
    wk = jax.random.uniform(kk, (C, H), jnp.float32, -bound, bound)
    wv = jax.random.uniform(kv, (C, H), jnp.float32, -bound, bound)
    w_qkv = jnp.concatenate([wq, wk, wv], axis=1)   # (C, 3H)

    out = head_forward(x, w_qkv)
    out = jax.block_until_ready(out)

    ref = head_reference(x, w_qkv)
    assert out.shape == (B, T, H)
    # bf16 MXU operands with f32 accumulation -> relaxed tolerance vs f32 ref.
    assert jnp.allclose(out, ref, atol=2e-2, rtol=2e-2), "mismatch vs reference"

    # TODO(synk): self.dropout is defined in the module but never applied in
    # forward(), so no dropout is implemented here.
    print("KERNEL_OK")
</pallas_src>

<mosaic_0001>
module attributes {stable_mosaic.version = 11 : i64} {
  func.func @fused_head_kernel(%arg0: i32, %arg1: i32, %arg2: memref<1x256x384xf32, #tpu.memory_space<vmem>>, %arg3: memref<384x384xf32, #tpu.memory_space<vmem>>, %arg4: memref<1x128x128xf32, #tpu.memory_space<vmem>>) attributes {dimension_semantics = [#tpu.dimension_semantics<parallel>, #tpu.dimension_semantics<parallel>], iteration_bounds = array<i64: 2, 2>, scalar_prefetch = 0 : i64, scratch_operands = 0 : i64, tpu.core_type = #tpu.core_type<tc>, window_params = [{transform_indices = @transform_0, window_bounds = array<i64: 1, 256, 384>}, {pipeline_mode = #tpu.pipeline_mode<synchronous>, transform_indices = @transform_1, window_bounds = array<i64: 384, 384>}, {transform_indices = @transform_2, window_bounds = array<i64: 1, 128, 128>}]} {
    %c0 = arith.constant 0 : index
    %c0_0 = arith.constant 0 : index
    %0 = vector.load %arg3[%c0, %c0_0] : memref<384x384xf32, #tpu.memory_space<vmem>>, vector<384x384xf32>
    %1 = vector.extract_strided_slice %0 {offsets = [0, 0], sizes = [384, 128], strides = [1, 1]} : vector<384x384xf32> to vector<384x128xf32>
    %2 = arith.truncf %1 : vector<384x128xf32> to vector<384x128xbf16>
    %3 = vector.extract_strided_slice %0 {offsets = [0, 128], sizes = [384, 256], strides = [1, 1]} : vector<384x384xf32> to vector<384x256xf32>
    %4 = arith.truncf %3 : vector<384x256xf32> to vector<384x256xbf16>
    %c0_1 = arith.constant 0 : index
    %c0_2 = arith.constant 0 : index
    %c0_3 = arith.constant 0 : index
    %5 = vector.load %arg2[%c0_1, %c0_2, %c0_3] : memref<1x256x384xf32, #tpu.memory_space<vmem>>, vector<1x256x384xf32>
    %6 = vector.shape_cast %5 : vector<1x256x384xf32> to vector<256x384xf32>
    %7 = arith.truncf %6 : vector<256x384xf32> to vector<256x384xbf16>
    %cst = arith.constant dense<0.000000e+00> : vector<256x256xf32>
    %8 = tpu.matmul %7, %4, %cst {dimension_numbers = #tpu.dot_dimension_numbers<[1], [0], [0], [1], [0, 0, 1, 1], [], []>} : vector<256x384xbf16>, vector<384x256xbf16>, vector<256x256xf32> -> vector<256x256xf32>
    %9 = arith.truncf %8 : vector<256x256xf32> to vector<256x256xbf16>
    %10 = vector.extract_strided_slice %9 {offsets = [0, 0], sizes = [256, 128], strides = [1, 1]} : vector<256x256xbf16> to vector<256x128xbf16>
    %11 = vector.extract_strided_slice %9 {offsets = [0, 128], sizes = [256, 128], strides = [1, 1]} : vector<256x256xbf16> to vector<256x128xbf16>
    %c128_i32 = arith.constant 128 : i32
    %12 = arith.muli %arg1, %c128_i32 : i32
    %13 = tpu.assume_multiple %12, 128 : i32
    %c0_4 = arith.constant 0 : index
    %14 = arith.index_cast %13 : i32 to index
    %c0_5 = arith.constant 0 : index
    %15 = vector.load %arg2[%c0_4, %14, %c0_5] : memref<1x256x384xf32, #tpu.memory_space<vmem>>, vector<1x128x384xf32>
    %16 = vector.shape_cast %15 : vector<1x128x384xf32> to vector<128x384xf32>
    %17 = arith.truncf %16 : vector<128x384xf32> to vector<128x384xbf16>
    %cst_6 = arith.constant dense<0.000000e+00> : vector<128x128xf32>
    %18 = tpu.matmul %17, %2, %cst_6 {dimension_numbers = #tpu.dot_dimension_numbers<[1], [0], [0], [1], [0, 0, 1, 1], [], []>} : vector<128x384xbf16>, vector<384x128xbf16>, vector<128x128xf32> -> vector<128x128xf32>
    %cst_7 = arith.constant 0.0510310382 : f32
    %19 = vector.broadcast %cst_7 : f32 to vector<128x128xf32>
    %20 = arith.mulf %18, %19 : vector<128x128xf32>
    %21 = arith.truncf %20 : vector<128x128xf32> to vector<128x128xbf16>
    %cst_8 = arith.constant dense<0.000000e+00> : vector<128x256xf32>
    %22 = tpu.matmul %21, %10, %cst_8 {dimension_numbers = #tpu.dot_dimension_numbers<[1], [1], [0], [0], [0, 0, 1, 0], [], []>} : vector<128x128xbf16>, vector<256x128xbf16>, vector<128x256xf32> -> vector<128x256xf32>
    %23 = tpu.iota {dimensions = array<i32: 0>} : vector<128x256xi32>
    %24 = vector.broadcast %13 : i32 to vector<128x256xi32>
    %25 = arith.addi %24, %23 : vector<128x256xi32>
    %26 = tpu.iota {dimensions = array<i32: 1>} : vector<128x256xi32>
    %27 = arith.cmpi sle, %26, %25 : vector<128x256xi32>
    %cst_9 = arith.constant -1.000000e+30 : f32
    %28 = vector.broadcast %cst_9 : f32 to vector<128x256xf32>
    %29 = arith.select %27, %22, %28 : vector<128x256xi1>, vector<128x256xf32>
    %cst_10 = arith.constant dense<0xFF800000> : vector<128xf32>
    %30 = vector.multi_reduction <maximumf>, %29, %cst_10 [1] : vector<128x256xf32> to vector<128xf32>
    %31 = vector.shape_cast %30 : vector<128xf32> to vector<128x1xf32>
    %32 = vector.broadcast %31 : vector<128x1xf32> to vector<128x256xf32>
    %33 = arith.subf %29, %32 : vector<128x256xf32>
    %34 = math.exp %33 : vector<128x256xf32>
    %cst_11 = arith.constant dense<0.000000e+00> : vector<128xf32>
    %35 = vector.multi_reduction <add>, %34, %cst_11 [1] : vector<128x256xf32> to vector<128xf32>
    %36 = vector.shape_cast %35 : vector<128xf32> to vector<128x1xf32>
    %37 = tpu.reciprocal %36 {approx = true} : vector<128x1xf32> -> vector<128x1xf32>
    %38 = arith.mulf %36, %37 : vector<128x1xf32>
    %cst_12 = arith.constant 2.000000e+00 : f32
    %39 = vector.broadcast %cst_12 : f32 to vector<128x1xf32>
    %40 = arith.subf %39, %38 : vector<128x1xf32>
    %41 = arith.mulf %37, %40 : vector<128x1xf32>
    %42 = arith.truncf %34 : vector<128x256xf32> to vector<128x256xbf16>
    %cst_13 = arith.constant dense<0.000000e+00> : vector<128x128xf32>
    %43 = tpu.matmul %42, %11, %cst_13 {dimension_numbers = #tpu.dot_dimension_numbers<[1], [0], [0], [1], [0, 0, 1, 1], [], []>} : vector<128x256xbf16>, vector<256x128xbf16>, vector<128x128xf32> -> vector<128x128xf32>
    %44 = vector.broadcast %41 : vector<128x1xf32> to vector<128x128xf32>
    %45 = arith.mulf %43, %44 : vector<128x128xf32>
    %c0_14 = arith.constant 0 : index
    %c0_15 = arith.constant 0 : index
    %c0_16 = arith.constant 0 : index
    %46 = vector.load %arg4[%c0_14, %c0_15, %c0_16] : memref<1x128x128xf32, #tpu.memory_space<vmem>>, vector<1x128x128xf32>
    %47 = vector.shape_cast %46 : vector<1x128x128xf32> to vector<128x128xf32>
    %48 = vector.shape_cast %45 : vector<128x128xf32> to vector<1x128x128xf32>
    tpu.vector_store %arg4[%c0_14, %c0_15, %c0_16], %48 {strides = array<i32>} : memref<1x128x128xf32, #tpu.memory_space<vmem>>, vector<1x128x128xf32>,
    return
  }
  func.func @transform_0(%arg0: i32, %arg1: i32) -> (i32, i32, i32) {
    %c0_i32 = arith.constant 0 : i32
    %c0_i32_0 = arith.constant 0 : i32
    %c0_i32_1 = arith.constant 0 : i32
    return %arg0, %c0_i32, %c0_i32_0 : i32, i32, i32
  }
  func.func @transform_1(%arg0: i32, %arg1: i32) -> (i32, i32) {
    %c0_i32 = arith.constant 0 : i32
    %c0_i32_0 = arith.constant 0 : i32
    %c0_i32_1 = arith.constant 0 : i32
    return %c0_i32, %c0_i32_0 : i32, i32
  }
  func.func @transform_2(%arg0: i32, %arg1: i32) -> (i32, i32, i32) {
    %c0_i32 = arith.constant 0 : i32
    %c0_i32_0 = arith.constant 0 : i32
    return %arg0, %arg1, %c0_i32 : i32, i32, i32
  }
}

</mosaic_0001>

<llo_original>
// kernel: tpu_custom_call.1
$region0: #{tpu_custom_call.1}
  #allocation0 [shape = 'u32[]', space=smem, size = 0x4, offset = 0x4, fixed_abs, tag = 'smem constant byte address 0x4 - core index']
  #allocation1 [shape = 'u32[144,128]{1,0:T(1,128)}', space=vmem, size = 0x12000, scoped, tag = 'internal scratch']
  %s0 = inlined_call_operand.hbm [shape: f32[2,256,384], index: 0, kind: input, shape index: {}]
  %s1 = inlined_call_operand.hbm [shape: f32[384,384], index: 1, kind: input, shape index: {}]
  %s2 = inlined_call_operand.hbm [shape: f32[2,256,128], index: 2, kind: output, shape index: {}]
  %s3 = sld [smem:[#allocation0]]
  $region49: #{tpu_custom_call.1} parent=0
    _
  %s5 = ssub.s32 1, %s3
  %s6 = scalar_select 0, %s5, %s3
  $region1: #{tpu_custom_call.1} parent=0
    #allocation2 [shape = 'u8[786432]{0}', space=vmem, size = 0xc0000, scoped, tag = 'input window, operand 0']
    #allocation3 [shape = 's32[2]{0}', space=sflag, size = 0x8, scoped, tag = 'scoped memory for tpu_custom_call.1']
    #allocation4 [shape = 's32[2]{0}', space=sflag, size = 0x8, scoped, tag = 'scoped memory for tpu_custom_call.1']
    #allocation5 [shape = 'u8[589824]{0}', space=vmem, size = 0x90000, scoped, tag = 'input window, operand 1, single buffered']
    #allocation6 [shape = 's32[1]{0}', space=sflag, size = 0x4, scoped, tag = 'scoped memory for tpu_custom_call.1']
    #allocation7 [shape = 'u8[131072]{0}', space=vmem, size = 0x20000, scoped, tag = 'output window, operand 0']
    %7 = vsyncpa [#allocation3], 0
    %s8 = scalar_lea.sflag [#allocation3], 1
    %9 = vsyncpa %s8, 0
    %10 = vsyncpa [#allocation6], 0
    %11 = vsyncpa [#allocation4], 0
    %s12 = scalar_lea.sflag [#allocation4], 1
    %13 = vsyncpa %s12, 0
    loop: start=0, step=1, limit=6
    $region2: #{tpu_custom_call.1} parent=1 // loop_pre_header
      _
    $region3: #{tpu_custom_call.1} parent=1 // loop_header
      %s15 = sphi 0, %s19
      %p16 = scmp.ge.s32.totalorder %s15, 6
      %s22 = sphi 0, %s34
      %s23 = sphi 0, %s30
      %s24 = sphi 0, %s22
      %s25 = sphi 0, %s23
      %s26 = sphi 0, %s24
      %s27 = sphi 0, %s25
      %s37 = sphi 0, %s39
      %s40 = sphi 0, %s37
      %s41 = sphi 0, %s40
      %s57 = sphi 0, %s41
      %s61 = sphi 0, %s61
      %s63 = sphi 0, %s61
      %s64 = sphi 0, %s63
      %s78 = sphi 0, %s64
      %s86 = sphi 0, %s88
      %s89 = sphi 0, %s86
      %s90 = sphi 0, %s89
      %s106 = sphi 0, %s90
    $region4: #{tpu_custom_call.1} parent=1 // loop_header_branch
      %18 = sbr.rel (%p16) target = $region8
    $region5: #{tpu_custom_call.1} parent=1 // loop_body
      %s20 = ssub.s32 %s15, 1
      %s21 = ssub.s32 %s15, 2
      %s28 = sadd.s32 1, %s23
      %p29 = scmp.ge.s32.totalorder %s28, 2
      %s30 = scalar_select %p29, 0, %s28
      %s31 = sadd.s32 1, %s22
      %s32 = scalar_select %p29, %s31, %s22
      %p33 = scmp.ge.s32.totalorder %s32, 2
      %s34 = scalar_select %p33, 0, %s32
      %s35 = ssub.s32 %s22, %s34
      %p36 = scmp.eq.s32.totalorder %s35, 0
      %s38 = sadd.s32 %s37, 1
      %s39 = scalar_select %p36, %s37, %s38
      %p42 = pneg %p36
      %p43 = scmp.eq.s32.totalorder %s15, 3
      %p44 = por %p42, %p43
      %p45 = scmp.ne.s32.totalorder %s37, %s40
      %p46 = scmp.eq.s32.totalorder %s15, 0
      %p47 = por %p45, %p46
      %p48 = scmp.ne.s32.totalorder %s37, %s40
      %p49 = scmp.eq.s32.totalorder %s20, 3
      %p50 = por %p48, %p49
      %p51 = scmp.ne.s32.totalorder %s40, %s41
      %p52 = scmp.eq.s32.totalorder %s20, 0
      %p53 = por %p51, %p52
      %p54 = scmp.ne.s32.totalorder %s40, %s41
      %p55 = scmp.eq.s32.totalorder %s21, 3
      %p56 = por %p54, %p55
      %p58 = scmp.ne.s32.totalorder %s41, %s57
      %p59 = scmp.eq.s32.totalorder %s21, 0
      %p60 = por %p58, %p59
      %s62 = sadd.s32 %s61, 1
      %p65 = scmp.eq.s32.totalorder %s15, 3
      %p66 = scmp.ne.s32.totalorder %s61, %s63
      %p67 = scmp.eq.s32.totalorder %s15, 0
      %p68 = por %p66, %p67
      %p69 = scmp.ne.s32.totalorder %s61, %s63
      %p70 = scmp.eq.s32.totalorder %s20, 3
      %p71 = por %p69, %p70
      %p72 = scmp.ne.s32.totalorder %s63, %s64
      %p73 = scmp.eq.s32.totalorder %s20, 0
      %p74 = por %p72, %p73
      %p75 = scmp.ne.s32.totalorder %s63, %s64
      %p76 = scmp.eq.s32.totalorder %s21, 3
      %p77 = por %p75, %p76
      %p79 = scmp.ne.s32.totalorder %s64, %s78
      %p80 = scmp.eq.s32.totalorder %s21, 0
      %p81 = por %p79, %p80
      %s82 = ssub.s32 %s22, %s34
      %s83 = ssub.s32 %s23, %s30
      %s84 = sor.u32 %s82, %s83
      %p85 = scmp.eq.s32.totalorder %s84, 0
      %s87 = sadd.s32 %s86, 1
      %s88 = scalar_select %p85, %s86, %s87
      %p91 = pneg %p85
      %p92 = scmp.eq.s32.totalorder %s15, 3
      %p93 = por %p91, %p92
      %p94 = scmp.ne.s32.totalorder %s86, %s89
      %p95 = scmp.eq.s32.totalorder %s15, 0
      %p96 = por %p94, %p95
      %p97 = scmp.ne.s32.totalorder %s86, %s89
      %p98 = scmp.eq.s32.totalorder %s20, 3
      %p99 = por %p97, %p98
      %p100 = scmp.ne.s32.totalorder %s89, %s90
      %p101 = scmp.eq.s32.totalorder %s20, 0
      %p102 = por %p100, %p101
      %p103 = scmp.ne.s32.totalorder %s89, %s90
      %p104 = scmp.eq.s32.totalorder %s21, 3
      %p105 = por %p103, %p104
      %p107 = scmp.ne.s32.totalorder %s90, %s106
      %p108 = scmp.eq.s32.totalorder %s21, 0
      %p109 = por %p107, %p108
      %p110 = scmp.le.s32.totalorder 1, %s15
      %p111 = scmp.lt.s32.totalorder %s15, 5
      %p112 = pnand %p110, %p111
      %p113 = pneg %p112
      // Predicated region
      $region9: #{tpu_custom_call.1} parent=5 // pred_check
        _
      $region10: #{tpu_custom_call.1} parent=5 // pred_check_branch
        %115 = sbr.rel (%p112) target = $region12
      $region11: #{tpu_custom_call.1} parent=5 // pred_region
        %s116 = ssub.s32 %s15, 1
        // Predicated region
        $region13: #{tpu_custom_call.1} parent=11 // pred_check
          %p117 = pneg %p74
        $region14: #{tpu_custom_call.1} parent=11 // pred_check_branch
          %119 = sbr.rel (%p117) target = $region16
        $region15: #{tpu_custom_call.1} parent=11 // pred_region
          %s121 = ssub.s32 18432, 18432
          %122 = vsyncadd [#allocation6], %s121
          %s123 = sshll.u32 [#allocation5], 4
          %s124 = int_to_ptr.vmem [resolvable:$true] %s123
          %129 = dma.hbm_to_vmem [thread:$0]  %s1, 18432, %s124, [#allocation6], 384, 384, 24
        $region16: #{tpu_custom_call.1} parent=11 // pred_fallthru
          _
      $region12: #{tpu_custom_call.1} parent=5 // pred_fallthru
        _
      %p130 = scmp.lt.s32.totalorder %s15, 4
      // Predicated region
      $region17: #{tpu_custom_call.1} parent=5 // pred_check
        %p131 = pneg %p130
      $region18: #{tpu_custom_call.1} parent=5 // pred_check_branch
        %133 = sbr.rel (%p131) target = $region20
      $region19: #{tpu_custom_call.1} parent=5 // pred_region
        // Predicated region
        $region21: #{tpu_custom_call.1} parent=19 // pred_check
          %p134 = pneg %p47
        $region22: #{tpu_custom_call.1} parent=19 // pred_check_branch
          %136 = sbr.rel (%p134) target = $region24
        $region23: #{tpu_custom_call.1} parent=19 // pred_region
          %s137 = sand.u32 %s37, 1
          %s138 = scalar_lea.sflag [#allocation3], %s137
          %s139 = sand.u32 %s37, 1
          %s140 = smul.addr %s139, 768
          %s141 = scalar_lea.vmem [#allocation2], %s140
          %s143 = ssub.s32 12288, 12288
          %144 = vsyncadd %s138, %s143
          %s145 = smul.addr %s22, 96
          %s146 = smul.addr %s145, 128
          %s147 = scalar_lea.hbm %s0, %s146
          %s148 = sshll.u32 %s141, 4
          %s149 = int_to_ptr.vmem [resolvable:$true] %s148
          %154 = dma.hbm_to_vmem [thread:$0]  %s147, 12288, %s149, %s138, 384, 384, 24
        $region24: #{tpu_custom_call.1} parent=19 // pred_fallthru
          _
      $region20: #{tpu_custom_call.1} parent=5 // pred_fallthru
        _
      %p155 = scmp.le.s32.totalorder 1, %s15
      %p156 = scmp.lt.s32.totalorder %s15, 5
      %p157 = pnand %p155, %p156
      %p158 = pneg %p157
      // Predicated region
      $region25: #{tpu_custom_call.1} parent=5 // pred_check
        _
      $region26: #{tpu_custom_call.1} parent=5 // pred_check_branch
        %160 = sbr.rel (%p157) target = $region28
      $region27: #{tpu_custom_call.1} parent=5 // pred_region
        %s161 = ssub.s32 %s15, 1
        %s162 = sand.u32 %s40, 1
        %s163 = scalar_lea.sflag [#allocation3], %s162
        %s164 = sand.u32 %s40, 1
        %s165 = smul.addr %s164, 768
        %s166 = scalar_lea.vmem [#allocation2], %s165
        // Predicated region
        $region29: #{tpu_custom_call.1} parent=27 // pred_check
          %p167 = pneg %p53
        $region30: #{tpu_custom_call.1} parent=27 // pred_check_branch
          %169 = sbr.rel (%p167) target = $region32
        $region31: #{tpu_custom_call.1} parent=27 // pred_region
          %170 = dma.done %s163, 12288
        $region32: #{tpu_custom_call.1} parent=27 // pred_fallthru
          _
        // Predicated region
        $region33: #{tpu_custom_call.1} parent=27 // pred_check
          %p171 = pneg %p74
        $region34: #{tpu_custom_call.1} parent=27 // pred_check_branch
          %173 = sbr.rel (%p171) target = $region36
        $region35: #{tpu_custom_call.1} parent=27 // pred_region
          %174 = dma.done [#allocation6], 18432
        $region36: #{tpu_custom_call.1} parent=27 // pred_fallthru
          _
        %s175 = sand.u32 %s40, 1
        %s176 = scalar_lea.sflag [#allocation3], %s175
        %s177 = sand.u32 %s40, 1
        %s178 = smul.addr %s177, 768
        %s179 = scalar_lea.vmem [#allocation2], %s178
        %p180 = pneg %p53
        %p181 = pneg %p50
        %p182 = pneg %p74
        %p183 = pneg %p71
        %p184 = pneg %p102
        %p185 = pneg %p99
        %s186 = sand.u32 %s89, 1
        %s187 = scalar_lea.sflag [#allocation4], %s186
        %s188 = sand.u32 %s89, 1
        %s189 = smul.addr %s188, 128
        %s190 = scalar_lea.vmem [#allocation7], %s189
        %s191 = smul.u32 16, %s25
        %v193 = vld [vmem:[#allocation5] sm:$0xff]
        %v194 = vld [vmem:[#allocation5 + $0x8] sm:$0xff]
        %v195 = vld [vmem:[#allocation5 + $0x10] sm:$0xff]
        %v196 = vld [vmem:[#allocation5 + $0x18] sm:$0xff]
        %v197 = vld [vmem:[#allocation5 + $0x20] sm:$0xff]
        %v198 = vld [vmem:[#allocation5 + $0x28] sm:$0xff]
        %v199 = vld [vmem:[#allocation5 + $0x30] sm:$0xff]
        %v200 = vld [vmem:[#allocation5 + $0x38] sm:$0xff]
        %v201 = vld [vmem:[#allocation5 + $0x40] sm:$0xff]
        %v202 = vld [vmem:[#allocation5 + $0x48] sm:$0xff]
        %v203 = vld [vmem:[#allocation5 + $0x50] sm:$0xff]
        %v204 = vld [vmem:[#allocation5 + $0x58] sm:$0xff]
        %v205 = vld [vmem:[#allocation5 + $0x60] sm:$0xff]
        %v206 = vld [vmem:[#allocation5 + $0x68] sm:$0xff]
        %v207 = vld [vmem:[#allocation5 + $0x70] sm:$0xff]
        %v208 = vld [vmem:[#allocation5 + $0x78] sm:$0xff]
        %v209 = vld [vmem:[#allocation5 + $0x80] sm:$0xff]
        %v210 = vld [vmem:[#allocation5 + $0x88] sm:$0xff]
        %v211 = vld [vmem:[#allocation5 + $0x90] sm:$0xff]
        %v212 = vld [vmem:[#allocation5 + $0x98] sm:$0xff]
        %v213 = vld [vmem:[#allocation5 + $0xa0] sm:$0xff]
        %v214 = vld [vmem:[#allocation5 + $0xa8] sm:$0xff]
        %v215 = vld [vmem:[#allocation5 + $0xb0] sm:$0xff]
        %v216 = vld [vmem:[#allocation5 + $0xb8] sm:$0xff]
        %v217 = vld [vmem:[#allocation5 + $0xc0] sm:$0xff]
        %v218 = vld [vmem:[#allocation5 + $0xc8] sm:$0xff]
        %v219 = vld [vmem:[#allocation5 + $0xd0] sm:$0xff]
        %v220 = vld [vmem:[#allocation5 + $0xd8] sm:$0xff]
        %v221 = vld [vmem:[#allocation5 + $0xe0] sm:$0xff]
        %v222 = vld [vmem:[#allocation5 + $0xe8] sm:$0xff]
        %v223 = vld [vmem:[#allocation5 + $0xf0] sm:$0xff]
        %v224 = vld [vmem:[#allocation5 + $0xf8] sm:$0xff]
        %v225 = vld [vmem:[#allocation5 + $0x100] sm:$0xff]
        %v226 = vld [vmem:[#allocation5 + $0x108] sm:$0xff]
        %v227 = vld [vmem:[#allocation5 + $0x110] sm:$0xff]
        %v228 = vld [vmem:[#allocation5 + $0x118] sm:$0xff]
        %v229 = vld [vmem:[#allocation5 + $0x120] sm:$0xff]
        %v230 = vld [vmem:[#allocation5 + $0x128] sm:$0xff]
        %v231 = vld [vmem:[#allocation5 + $0x130] sm:$0xff]
        %v232 = vld [vmem:[#allocation5 + $0x138] sm:$0xff]
        %v233 = vld [vmem:[#allocation5 + $0x140] sm:$0xff]
        %v234 = vld [vmem:[#allocation5 + $0x148] sm:$0xff]
        %v235 = vld [vmem:[#allocation5 + $0x150] sm:$0xff]
        %v236 = vld [vmem:[#allocation5 + $0x158] sm:$0xff]
        %v237 = vld [vmem:[#allocation5 + $0x160] sm:$0xff]
        %v238 = vld [vmem:[#allocation5 + $0x168] sm:$0xff]
        %v239 = vld [vmem:[#allocation5 + $0x170] sm:$0xff]
        %v240 = vld [vmem:[#allocation5 + $0x178] sm:$0xff]
        %v241 = vld [vmem:[#allocation5 + $0x180] sm:$0xff]
        %v242 = vld [vmem:[#allocation5 + $0x188] sm:$0xff]
        %v243 = vld [vmem:[#allocation5 + $0x190] sm:$0xff]
        %v244 = vld [vmem:[#allocation5 + $0x198] sm:$0xff]
        %v245 = vld [vmem:[#allocation5 + $0x1a0] sm:$0xff]
        %v246 = vld [vmem:[#allocation5 + $0x1a8] sm:$0xff]
        %v247 = vld [vmem:[#allocation5 + $0x1b0] sm:$0xff]
        %v248 = vld [vmem:[#allocation5 + $0x1b8] sm:$0xff]
        %v249 = vld [vmem:[#allocation5 + $0x1c0] sm:$0xff]
        %v250 = vld [vmem:[#allocation5 + $0x1c8] sm:$0xff]
        %v251 = vld [vmem:[#allocation5 + $0x1d0] sm:$0xff]
        %v252 = vld [vmem:[#allocation5 + $0x1d8] sm:$0xff]
        %v253 = vld [vmem:[#allocation5 + $0x1e0] sm:$0xff]
        %v254 = vld [vmem:[#allocation5 + $0x1e8] sm:$0xff]
        %v255 = vld [vmem:[#allocation5 + $0x1f0] sm:$0xff]
        %v256 = vld [vmem:[#allocation5 + $0x1f8] sm:$0xff]
        %v257 = vld [vmem:[#allocation5 + $0x200] sm:$0xff]
        %v258 = vld [vmem:[#allocation5 + $0x208] sm:$0xff]
        %v259 = vld [vmem:[#allocation5 + $0x210] sm:$0xff]
        %v260 = vld [vmem:[#allocation5 + $0x218] sm:$0xff]
        %v261 = vld [vmem:[#allocation5 + $0x220] sm:$0xff]
        %v262 = vld [vmem:[#allocation5 + $0x228] sm:$0xff]
        %v263 = vld [vmem:[#allocation5 + $0x230] sm:$0xff]
        %v264 = vld [vmem:[#allocation5 + $0x238] sm:$0xff]
        %v265 = vld [vmem:[#allocation5 + $0x240] sm:$0xff]
        %v266 = vld [vmem:[#allocation5 + $0x248] sm:$0xff]
        %v267 = vld [vmem:[#allocation5 + $0x250] sm:$0xff]
        %v268 = vld [vmem:[#allocation5 + $0x258] sm:$0xff]
        %v269 = vld [vmem:[#allocation5 + $0x260] sm:$0xff]
        %v270 = vld [vmem:[#allocation5 + $0x268] sm:$0xff]
        %v271 = vld [vmem:[#allocation5 + $0x270] sm:$0xff]
        %v272 = vld [vmem:[#allocation5 + $0x278] sm:$0xff]
        %v273 = vld [vmem:[#allocation5 + $0x280] sm:$0xff]
        %v274 = vld [vmem:[#allocation5 + $0x288] sm:$0xff]
        %v275 = vld [vmem:[#allocation5 + $0x290] sm:$0xff]
        %v276 = vld [vmem:[#allocation5 + $0x298] sm:$0xff]
        %v277 = vld [vmem:[#allocation5 + $0x2a0] sm:$0xff]
        %v278 = vld [vmem:[#allocation5 + $0x2a8] sm:$0xff]
        %v279 = vld [vmem:[#allocation5 + $0x2b0] sm:$0xff]
        %v280 = vld [vmem:[#allocation5 + $0x2b8] sm:$0xff]
        %v281 = vld [vmem:[#allocation5 + $0x2c0] sm:$0xff]
        %v282 = vld [vmem:[#allocation5 + $0x2c8] sm:$0xff]
        %v283 = vld [vmem:[#allocation5 + $0x2d0] sm:$0xff]
        %v284 = vld [vmem:[#allocation5 + $0x2d8] sm:$0xff]
        %v285 = vld [vmem:[#allocation5 + $0x2e0] sm:$0xff]
        %v286 = vld [vmem:[#allocation5 + $0x2e8] sm:$0xff]
        %v287 = vld [vmem:[#allocation5 + $0x2f0] sm:$0xff]
        %v288 = vld [vmem:[#allocation5 + $0x2f8] sm:$0xff]
        %v289 = vld [vmem:[#allocation5 + $0x300] sm:$0xff]
        %v290 = vld [vmem:[#allocation5 + $0x308] sm:$0xff]
        %v291 = vld [vmem:[#allocation5 + $0x310] sm:$0xff]
        %v292 = vld [vmem:[#allocation5 + $0x318] sm:$0xff]
        %v293 = vld [vmem:[#allocation5 + $0x320] sm:$0xff]
        %v294 = vld [vmem:[#allocation5 + $0x328] sm:$0xff]
        %v295 = vld [vmem:[#allocation5 + $0x330] sm:$0xff]
        %v296 = vld [vmem:[#allocation5 + $0x338] sm:$0xff]
        %v297 = vld [vmem:[#allocation5 + $0x340] sm:$0xff]
        %v298 = vld [vmem:[#allocation5 + $0x348] sm:$0xff]
        %v299 = vld [vmem:[#allocation5 + $0x350] sm:$0xff]
        %v300 = vld [vmem:[#allocation5 + $0x358] sm:$0xff]
        %v301 = vld [vmem:[#allocation5 + $0x360] sm:$0xff]
        %v302 = vld [vmem:[#allocation5 + $0x368] sm:$0xff]
        %v303 = vld [vmem:[#allocation5 + $0x370] sm:$0xff]
        %v304 = vld [vmem:[#allocation5 + $0x378] sm:$0xff]
        %v305 = vld [vmem:[#allocation5 + $0x380] sm:$0xff]
        %v306 = vld [vmem:[#allocation5 + $0x388] sm:$0xff]
        %v307 = vld [vmem:[#allocation5 + $0x390] sm:$0xff]
        %v308 = vld [vmem:[#allocation5 + $0x398] sm:$0xff]
        %v309 = vld [vmem:[#allocation5 + $0x3a0] sm:$0xff]
        %v310 = vld [vmem:[#allocation5 + $0x3a8] sm:$0xff]
        %v311 = vld [vmem:[#allocation5 + $0x3b0] sm:$0xff]
        %v312 = vld [vmem:[#allocation5 + $0x3b8] sm:$0xff]
        %v313 = vld [vmem:[#allocation5 + $0x3c0] sm:$0xff]
        %v314 = vld [vmem:[#allocation5 + $0x3c8] sm:$0xff]
        %v315 = vld [vmem:[#allocation5 + $0x3d0] sm:$0xff]
        %v316 = vld [vmem:[#allocation5 + $0x3d8] sm:$0xff]
        %v317 = vld [vmem:[#allocation5 + $0x3e0] sm:$0xff]
        %v318 = vld [vmem:[#allocation5 + $0x3e8] sm:$0xff]
        %v319 = vld [vmem:[#allocation5 + $0x3f0] sm:$0xff]
        %v320 = vld [vmem:[#allocation5 + $0x3f8] sm:$0xff]
        %v321 = vld [vmem:[#allocation5 + $0x400] sm:$0xff]
        %v322 = vld [vmem:[#allocation5 + $0x408] sm:$0xff]
        %v323 = vld [vmem:[#allocation5 + $0x410] sm:$0xff]
        %v324 = vld [vmem:[#allocation5 + $0x418] sm:$0xff]
        %v325 = vld [vmem:[#allocation5 + $0x420] sm:$0xff]
        %v326 = vld [vmem:[#allocation5 + $0x428] sm:$0xff]
        %v327 = vld [vmem:[#allocation5 + $0x430] sm:$0xff]
        %v328 = vld [vmem:[#allocation5 + $0x438] sm:$0xff]
        %v329 = vld [vmem:[#allocation5 + $0x440] sm:$0xff]
        %v330 = vld [vmem:[#allocation5 + $0x448] sm:$0xff]
        %v331 = vld [vmem:[#allocation5 + $0x450] sm:$0xff]
        %v332 = vld [vmem:[#allocation5 + $0x458] sm:$0xff]
        %v333 = vld [vmem:[#allocation5 + $0x460] sm:$0xff]
        %v334 = vld [vmem:[#allocation5 + $0x468] sm:$0xff]
        %v335 = vld [vmem:[#allocation5 + $0x470] sm:$0xff]
        %v336 = vld [vmem:[#allocation5 + $0x478] sm:$0xff]
        %v337 = vpack.c.bf16 %v196, %v193
        %v338 = vpack.c.bf16 %v202, %v199
        %v339 = vpack.c.bf16 %v208, %v205
        %v340 = vpack.c.bf16 %v214, %v211
        %v341 = vpack.c.bf16 %v220, %v217
        %v342 = vpack.c.bf16 %v226, %v223
        %v343 = vpack.c.bf16 %v232, %v229
        %v344 = vpack.c.bf16 %v238, %v235
        %v345 = vpack.c.bf16 %v244, %v241
        %v346 = vpack.c.bf16 %v250, %v247
        %v347 = vpack.c.bf16 %v256, %v253
        %v348 = vpack.c.bf16 %v262, %v259
        %v349 = vpack.c.bf16 %v268, %v265
        %v350 = vpack.c.bf16 %v274, %v271
        %v351 = vpack.c.bf16 %v280, %v277
        %v352 = vpack.c.bf16 %v286, %v283
        %v353 = vpack.c.bf16 %v292, %v289
        %v354 = vpack.c.bf16 %v298, %v295
        %v355 = vpack.c.bf16 %v304, %v301
        %v356 = vpack.c.bf16 %v310, %v307
        %v357 = vpack.c.bf16 %v316, %v313
        %v358 = vpack.c.bf16 %v322, %v319
        %v359 = vpack.c.bf16 %v328, %v325
        %v360 = vpack.c.bf16 %v334, %v331
        %v361 = vpack.c.bf16 %v197, %v194
        %v362 = vpack.c.bf16 %v198, %v195
        %v363 = vpack.c.bf16 %v203, %v200
        %v364 = vpack.c.bf16 %v204, %v201
        %v365 = vpack.c.bf16 %v209, %v206
        %v366 = vpack.c.bf16 %v210, %v207
        %v367 = vpack.c.bf16 %v215, %v212
        %v368 = vpack.c.bf16 %v216, %v213
        %v369 = vpack.c.bf16 %v221, %v218
        %v370 = vpack.c.bf16 %v222, %v219
        %v371 = vpack.c.bf16 %v227, %v224
        %v372 = vpack.c.bf16 %v228, %v225
        %v373 = vpack.c.bf16 %v233, %v230
        %v374 = vpack.c.bf16 %v234, %v231
        %v375 = vpack.c.bf16 %v239, %v236
        %v376 = vpack.c.bf16 %v240, %v237
        %v377 = vpack.c.bf16 %v245, %v242
        %v378 = vpack.c.bf16 %v246, %v243
        %v379 = vpack.c.bf16 %v251, %v248
        %v380 = vpack.c.bf16 %v252, %v249
        %v381 = vpack.c.bf16 %v257, %v254
        %v382 = vpack.c.bf16 %v258, %v255
        %v383 = vpack.c.bf16 %v263, %v260
        %v384 = vpack.c.bf16 %v264, %v261
        %v385 = vpack.c.bf16 %v269, %v266
        %v386 = vpack.c.bf16 %v270, %v267
        %v387 = vpack.c.bf16 %v275, %v272
        %v388 = vpack.c.bf16 %v276, %v273
        %v389 = vpack.c.bf16 %v281, %v278
        %v390 = vpack.c.bf16 %v282, %v279
        %v391 = vpack.c.bf16 %v287, %v284
        %v392 = vpack.c.bf16 %v288, %v285
        %v393 = vpack.c.bf16 %v293, %v290
        %v394 = vpack.c.bf16 %v294, %v291
        %v395 = vpack.c.bf16 %v299, %v296
        %v396 = vpack.c.bf16 %v300, %v297
        %v397 = vpack.c.bf16 %v305, %v302
        %v398 = vpack.c.bf16 %v306, %v303
        %v399 = vpack.c.bf16 %v311, %v308
        %v400 = vpack.c.bf16 %v312, %v309
        %v401 = vpack.c.bf16 %v317, %v314
        %v402 = vpack.c.bf16 %v318, %v315
        %v403 = vpack.c.bf16 %v323, %v320
        %v404 = vpack.c.bf16 %v324, %v321
        %v405 = vpack.c.bf16 %v329, %v326
        %v406 = vpack.c.bf16 %v330, %v327
        %v407 = vpack.c.bf16 %v335, %v332
        %v408 = vpack.c.bf16 %v336, %v333
        %v409 = vld [vmem:[%s166] sm:$0xff]
        %v410 = vld [vmem:[%s166 + $0x8] sm:$0xff]
        %v411 = vld [vmem:[%s166 + $0x10] sm:$0xff]
        %v412 = vld [vmem:[%s166 + $0x18] sm:$0xff]
        %v413 = vld [vmem:[%s166 + $0x20] sm:$0xff]
        %v414 = vld [vmem:[%s166 + $0x28] sm:$0xff]
        %v415 = vld [vmem:[%s166 + $0x30] sm:$0xff]
        %v416 = vld [vmem:[%s166 + $0x38] sm:$0xff]
        %v417 = vld [vmem:[%s166 + $0x40] sm:$0xff]
        %v418 = vld [vmem:[%s166 + $0x48] sm:$0xff]
        %v419 = vld [vmem:[%s166 + $0x50] sm:$0xff]
        %v420 = vld [vmem:[%s166 + $0x58] sm:$0xff]
        %v421 = vld [vmem:[%s166 + $0x60] sm:$0xff]
        %v422 = vld [vmem:[%s166 + $0x68] sm:$0xff]
        %v423 = vld [vmem:[%s166 + $0x70] sm:$0xff]
        %v424 = vld [vmem:[%s166 + $0x78] sm:$0xff]
        %v425 = vld [vmem:[%s166 + $0x80] sm:$0xff]
        %v426 = vld [vmem:[%s166 + $0x88] sm:$0xff]
        %v427 = vld [vmem:[%s166 + $0x90] sm:$0xff]
        %v428 = vld [vmem:[%s166 + $0x98] sm:$0xff]
        %v429 = vld [vmem:[%s166 + $0xa0] sm:$0xff]
        %v430 = vld [vmem:[%s166 + $0xa8] sm:$0xff]
        %v431 = vld [vmem:[%s166 + $0xb0] sm:$0xff]
        %v432 = vld [vmem:[%s166 + $0xb8] sm:$0xff]
        %v433 = vld [vmem:[%s166 + $0xc0] sm:$0xff]
        %v434 = vld [vmem:[%s166 + $0xc8] sm:$0xff]
        %v435 = vld [vmem:[%s166 + $0xd0] sm:$0xff]
        %v436 = vld [vmem:[%s166 + $0xd8] sm:$0xff]
        %v437 = vld [vmem:[%s166 + $0xe0] sm:$0xff]
        %v438 = vld [vmem:[%s166 + $0xe8] sm:$0xff]
        %v439 = vld [vmem:[%s166 + $0xf0] sm:$0xff]
        %v440 = vld [vmem:[%s166 + $0xf8] sm:$0xff]
        %v441 = vld [vmem:[%s166 + $0x100] sm:$0xff]
        %v442 = vld [vmem:[%s166 + $0x108] sm:$0xff]
        %v443 = vld [vmem:[%s166 + $0x110] sm:$0xff]
        %v444 = vld [vmem:[%s166 + $0x118] sm:$0xff]
        %v445 = vld [vmem:[%s166 + $0x120] sm:$0xff]
        %v446 = vld [vmem:[%s166 + $0x128] sm:$0xff]
        %v447 = vld [vmem:[%s166 + $0x130] sm:$0xff]
        %v448 = vld [vmem:[%s166 + $0x138] sm:$0xff]
        %v449 = vld [vmem:[%s166 + $0x140] sm:$0xff]
        %v450 = vld [vmem:[%s166 + $0x148] sm:$0xff]
        %v451 = vld [vmem:[%s166 + $0x150] sm:$0xff]
        %v452 = vld [vmem:[%s166 + $0x158] sm:$0xff]
        %v453 = vld [vmem:[%s166 + $0x160] sm:$0xff]
        %v454 = vld [vmem:[%s166 + $0x168] sm:$0xff]
        %v455 = vld [vmem:[%s166 + $0x170] sm:$0xff]
        %v456 = vld [vmem:[%s166 + $0x178] sm:$0xff]
        %v457 = vld [vmem:[%s166 + $0x180] sm:$0xff]
        %v458 = vld [vmem:[%s166 + $0x188] sm:$0xff]
        %v459 = vld [vmem:[%s166 + $0x190] sm:$0xff]
        %v460 = vld [vmem:[%s166 + $0x198] sm:$0xff]
        %v461 = vld [vmem:[%s166 + $0x1a0] sm:$0xff]
        %v462 = vld [vmem:[%s166 + $0x1a8] sm:$0xff]
        %v463 = vld [vmem:[%s166 + $0x1b0] sm:$0xff]
        %v464 = vld [vmem:[%s166 + $0x1b8] sm:$0xff]
        %v465 = vld [vmem:[%s166 + $0x1c0] sm:$0xff]
        %v466 = vld [vmem:[%s166 + $0x1c8] sm:$0xff]
        %v467 = vld [vmem:[%s166 + $0x1d0] sm:$0xff]
        %v468 = vld [vmem:[%s166 + $0x1d8] sm:$0xff]
        %v469 = vld [vmem:[%s166 + $0x1e0] sm:$0xff]
        %v470 = vld [vmem:[%s166 + $0x1e8] sm:$0xff]
        %v471 = vld [vmem:[%s166 + $0x1f0] sm:$0xff]
        %v472 = vld [vmem:[%s166 + $0x1f8] sm:$0xff]
        %v473 = vld [vmem:[%s166 + $0x200] sm:$0xff]
        %v474 = vld [vmem:[%s166 + $0x208] sm:$0xff]
        %v475 = vld [vmem:[%s166 + $0x210] sm:$0xff]
        %v476 = vld [vmem:[%s166 + $0x218] sm:$0xff]
        %v477 = vld [vmem:[%s166 + $0x220] sm:$0xff]
        %v478 = vld [vmem:[%s166 + $0x228] sm:$0xff]
        %v479 = vld [vmem:[%s166 + $0x230] sm:$0xff]
        %v480 = vld [vmem:[%s166 + $0x238] sm:$0xff]
        %v481 = vld [vmem:[%s166 + $0x240] sm:$0xff]
        %v482 = vld [vmem:[%s166 + $0x248] sm:$0xff]
        %v483 = vld [vmem:[%s166 + $0x250] sm:$0xff]
        %v484 = vld [vmem:[%s166 + $0x258] sm:$0xff]
        %v485 = vld [vmem:[%s166 + $0x260] sm:$0xff]
        %v486 = vld [vmem:[%s166 + $0x268] sm:$0xff]
        %v487 = vld [vmem:[%s166 + $0x270] sm:$0xff]
        %v488 = vld [vmem:[%s166 + $0x278] sm:$0xff]
        %v489 = vld [vmem:[%s166 + $0x280] sm:$0xff]
        %v490 = vld [vmem:[%s166 + $0x288] sm:$0xff]
        %v491 = vld [vmem:[%s166 + $0x290] sm:$0xff]
        %v492 = vld [vmem:[%s166 + $0x298] sm:$0xff]
        %v493 = vld [vmem:[%s166 + $0x2a0] sm:$0xff]
        %v494 = vld [vmem:[%s166 + $0x2a8] sm:$0xff]
        %v495 = vld [vmem:[%s166 + $0x2b0] sm:$0xff]
        %v496 = vld [vmem:[%s166 + $0x2b8] sm:$0xff]
        %v497 = vld [vmem:[%s166 + $0x2c0] sm:$0xff]
        %v498 = vld [vmem:[%s166 + $0x2c8] sm:$0xff]
        %v499 = vld [vmem:[%s166 + $0x2d0] sm:$0xff]
        %v500 = vld [vmem:[%s166 + $0x2d8] sm:$0xff]
        %v501 = vld [vmem:[%s166 + $0x2e0] sm:$0xff]
        %v502 = vld [vmem:[%s166 + $0x2e8] sm:$0xff]
        %v503 = vld [vmem:[%s166 + $0x2f0] sm:$0xff]
        %v504 = vld [vmem:[%s166 + $0x2f8] sm:$0xff]
        %v505 = vpack.c.bf16 %v412, %v409
        %v506 = vpack.c.bf16 %v413, %v410
        %v507 = vpack.c.bf16 %v414, %v411
        %v508 = vpack.c.bf16 %v418, %v415
        %v509 = vpack.c.bf16 %v419, %v416
        %v510 = vpack.c.bf16 %v420, %v417
        %v511 = vpack.c.bf16 %v424, %v421
        %v512 = vpack.c.bf16 %v425, %v422
        %v513 = vpack.c.bf16 %v426, %v423
        %v514 = vpack.c.bf16 %v430, %v427
        %v515 = vpack.c.bf16 %v431, %v428
        %v516 = vpack.c.bf16 %v432, %v429
        %v517 = vpack.c.bf16 %v436, %v433
        %v518 = vpack.c.bf16 %v437, %v434
        %v519 = vpack.c.bf16 %v438, %v435
        %v520 = vpack.c.bf16 %v442, %v439
        %v521 = vpack.c.bf16 %v443, %v440
        %v522 = vpack.c.bf16 %v444, %v441
        %v523 = vpack.c.bf16 %v448, %v445
        %v524 = vpack.c.bf16 %v449, %v446
        %v525 = vpack.c.bf16 %v450, %v447
        %v526 = vpack.c.bf16 %v454, %v451
        %v527 = vpack.c.bf16 %v455, %v452
        %v528 = vpack.c.bf16 %v456, %v453
        %v529 = vpack.c.bf16 %v460, %v457
        %v530 = vpack.c.bf16 %v461, %v458
        %v531 = vpack.c.bf16 %v462, %v459
        %v532 = vpack.c.bf16 %v466, %v463
        %v533 = vpack.c.bf16 %v467, %v464
        %v534 = vpack.c.bf16 %v468, %v465
        %v535 = vpack.c.bf16 %v472, %v469
        %v536 = vpack.c.bf16 %v473, %v470
        %v537 = vpack.c.bf16 %v474, %v471
        %v538 = vpack.c.bf16 %v478, %v475
        %v539 = vpack.c.bf16 %v479, %v476
        %v540 = vpack.c.bf16 %v480, %v477
        %v541 = vpack.c.bf16 %v484, %v481
        %v542 = vpack.c.bf16 %v485, %v482
        %v543 = vpack.c.bf16 %v486, %v483
        %v544 = vpack.c.bf16 %v490, %v487
        %v545 = vpack.c.bf16 %v491, %v488
        %v546 = vpack.c.bf16 %v492, %v489
        %v547 = vpack.c.bf16 %v496, %v493
        %v548 = vpack.c.bf16 %v497, %v494
        %v549 = vpack.c.bf16 %v498, %v495
        %v550 = vpack.c.bf16 %v502, %v499
        %v551 = vpack.c.bf16 %v503, %v500
        %v552 = vpack.c.bf16 %v504, %v501
        %553 = vmatprep.subr.bf16.mxu0 %v362
        %554 = vmatpush1.bf16.msra.mxu0 %v361
        %555 = vmatprep.subr.bf16.mxu0 %v364
        %556 = vmatpush1.bf16.msra.mxu0 %v363
        %557 = vmatprep.subr.bf16.mxu0 %v366
        %558 = vmatpush1.bf16.msra.mxu0 %v365
        %559 = vmatprep.subr.bf16.mxu0 %v368
        %560 = vmatpush1.bf16.msra.mxu0 %v367
        %561 = vmatprep.subr.bf16.mxu0 %v370
        %562 = vmatpush1.bf16.msra.mxu0 %v369
        %563 = vmatprep.subr.bf16.mxu0 %v372
        %564 = vmatpush1.bf16.msra.mxu0 %v371
        %565 = vmatprep.subr.bf16.mxu0 %v374
        %566 = vmatpush1.bf16.msra.mxu0 %v373
        %567 = vmatprep.subr.bf16.mxu0 %v376
        %568 = vmatpush1.bf16.msra.mxu0 %v375
        %569 = vmatprep.subr.bf16.mxu0 %v378
        %570 = vmatpush1.bf16.msra.mxu0 %v377
        %571 = vmatprep.subr.bf16.mxu0 %v380
        %572 = vmatpush1.bf16.msra.mxu0 %v379
        %573 = vmatprep.subr.bf16.mxu0 %v382
        %574 = vmatpush1.bf16.msra.mxu0 %v381
        %575 = vmatprep.subr.bf16.mxu0 %v384
        %576 = vmatpush1.bf16.msra.mxu0 %v383
        %577 = vmatprep.subr.bf16.mxu0 %v386
        %578 = vmatpush1.bf16.msra.mxu0 %v385
        %579 = vmatprep.subr.bf16.mxu0 %v388
        %580 = vmatpush1.bf16.msra.mxu0 %v387
        %581 = vmatprep.subr.bf16.mxu0 %v390
        %582 = vmatpush1.bf16.msra.mxu0 %v389
        %583 = vmatprep.subr.bf16.mxu0 %v392
        %584 = vmatpush1.bf16.msra.mxu0 %v391
        %585 = vmatprep.mubr.bf16.mxu0 %v506
        %586 = vmatmul.mubr.bf16.gmra.mrb[0].mxu0 %v505
        %v587 = vpop.f32.mrb[0].mxu0
        %v588 = vadd.f32 0.0, %v587
        %v589 = vpop.f32.mrb[0].mxu0
        %v590 = vadd.f32 0.0, %v589
        %v591 = vpop.f32.mrb[0].mxu0
        %v592 = vadd.f32 0.0, %v591
        %v593 = vpop.f32.mrb[0].mxu0
        %v594 = vadd.f32 0.0, %v593
        %595 = vmatprep.mubr.bf16.mxu0 %v509
        %596 = vmatmul.mubr.bf16.gmra.mrb[0].mxu0 %v508
        %v597 = vpop.f32.mrb[0].mxu0
        %v598 = vadd.f32 0.0, %v597
        %v599 = vpop.f32.mrb[0].mxu0
        %v600 = vadd.f32 0.0, %v599
        %v601 = vpop.f32.mrb[0].mxu0
        %v602 = vadd.f32 0.0, %v601
        %v603 = vpop.f32.mrb[0].mxu0
        %v604 = vadd.f32 0.0, %v603
        %605 = vmatprep.mubr.bf16.mxu0 %v512
        %606 = vmatmul.mubr.bf16.gmra.mrb[0].mxu0 %v511
        %v607 = vpop.f32.mrb[0].mxu0
        %v608 = vadd.f32 0.0, %v607
        %v609 = vpop.f32.mrb[0].mxu0
        %v610 = vadd.f32 0.0, %v609
        %v611 = vpop.f32.mrb[0].mxu0
        %v612 = vadd.f32 0.0, %v611
        %v613 = vpop.f32.mrb[0].mxu0
        %v614 = vadd.f32 0.0, %v613
        %615 = vmatprep.mubr.bf16.mxu0 %v515
        %616 = vmatmul.mubr.bf16.gmra.mrb[0].mxu0 %v514
        %v617 = vpop.f32.mrb[0].mxu0
        %v618 = vadd.f32 0.0, %v617
        %v619 = vpop.f32.mrb[0].mxu0
        %v620 = vadd.f32 0.0, %v619
        %v621 = vpop.f32.mrb[0].mxu0
        %v622 = vadd.f32 0.0, %v621
        %v623 = vpop.f32.mrb[0].mxu0
        %v624 = vadd.f32 0.0, %v623
        %625 = vmatprep.mubr.bf16.mxu0 %v518
        %626 = vmatmul.mubr.bf16.gmra.mrb[0].mxu0 %v517
        %v627 = vpop.f32.mrb[0].mxu0
        %v628 = vadd.f32 0.0, %v627
        %v629 = vpop.f32.mrb[0].mxu0
        %v630 = vadd.f32 0.0, %v629
        %v631 = vpop.f32.mrb[0].mxu0
        %v632 = vadd.f32 0.0, %v631
        %v633 = vpop.f32.mrb[0].mxu0
        %v634 = vadd.f32 0.0, %v633
        %635 = vmatprep.mubr.bf16.mxu0 %v521
        %636 = vmatmul.mubr.bf16.gmra.mrb[0].mxu0 %v520
        %v637 = vpop.f32.mrb[0].mxu0
        %v638 = vadd.f32 0.0, %v637
        %v639 = vpop.f32.mrb[0].mxu0
        %v640 = vadd.f32 0.0, %v639
        %v641 = vpop.f32.mrb[0].mxu0
        %v642 = vadd.f32 0.0, %v641
        %v643 = vpop.f32.mrb[0].mxu0
        %v644 = vadd.f32 0.0, %v643
        %645 = vmatprep.mubr.bf16.mxu0 %v524
        %646 = vmatmul.mubr.bf16.gmra.mrb[0].mxu0 %v523
        %v647 = vpop.f32.mrb[0].mxu0
        %v648 = vadd.f32 0.0, %v647
        %v649 = vpop.f32.mrb[0].mxu0
        %v650 = vadd.f32 0.0, %v649
        %v651 = vpop.f32.mrb[0].mxu0
        %v652 = vadd.f32 0.0, %v651
        %v653 = vpop.f32.mrb[0].mxu0
        %v654 = vadd.f32 0.0, %v653
        %655 = vmatprep.mubr.bf16.mxu0 %v527
        %656 = vmatmul.mubr.bf16.gmra.mrb[0].mxu0 %v526
        %v657 = vpop.f32.mrb[0].mxu0
        %v658 = vadd.f32 0.0, %v657
        %v659 = vpop.f32.mrb[0].mxu0
        %v660 = vadd.f32 0.0, %v659
        %v661 = vpop.f32.mrb[0].mxu0
        %v662 = vadd.f32 0.0, %v661
        %v663 = vpop.f32.mrb[0].mxu0
        %v664 = vadd.f32 0.0, %v663
        %665 = vmatprep.mubr.bf16.mxu0 %v530
        %666 = vmatmul.mubr.bf16.gmra.mrb[0].mxu0 %v529
        %v667 = vpop.f32.mrb[0].mxu0
        %v668 = vadd.f32 0.0, %v667
        %v669 = vpop.f32.mrb[0].mxu0
        %v670 = vadd.f32 0.0, %v669
        %v671 = vpop.f32.mrb[0].mxu0
        %v672 = vadd.f32 0.0, %v671
        %v673 = vpop.f32.mrb[0].mxu0
        %v674 = vadd.f32 0.0, %v673
        %675 = vmatprep.mubr.bf16.mxu0 %v533
        %676 = vmatmul.mubr.bf16.gmra.mrb[0].mxu0 %v532
        %v677 = vpop.f32.mrb[0].mxu0
        %v678 = vadd.f32 0.0, %v677
        %v679 = vpop.f32.mrb[0].mxu0
        %v680 = vadd.f32 0.0, %v679
        %v681 = vpop.f32.mrb[0].mxu0
        %v682 = vadd.f32 0.0, %v681
        %v683 = vpop.f32.mrb[0].mxu0
        %v684 = vadd.f32 0.0, %v683
        %685 = vmatprep.mubr.bf16.mxu0 %v536
        %686 = vmatmul.mubr.bf16.gmra.mrb[0].mxu0 %v535
        %v687 = vpop.f32.mrb[0].mxu0
        %v688 = vadd.f32 0.0, %v687
        %v689 = vpop.f32.mrb[0].mxu0
        %v690 = vadd.f32 0.0, %v689
        %v691 = vpop.f32.mrb[0].mxu0
        %v692 = vadd.f32 0.0, %v691
        %v693 = vpop.f32.mrb[0].mxu0
        %v694 = vadd.f32 0.0, %v693
        %695 = vmatprep.mubr.bf16.mxu0 %v539
        %696 = vmatmul.mubr.bf16.gmra.mrb[0].mxu0 %v538
        %v697 = vpop.f32.mrb[0].mxu0
        %v698 = vadd.f32 0.0, %v697
        %v699 = vpop.f32.mrb[0].mxu0
        %v700 = vadd.f32 0.0, %v699
        %v701 = vpop.f32.mrb[0].mxu0
        %v702 = vadd.f32 0.0, %v701
        %v703 = vpop.f32.mrb[0].mxu0
        %v704 = vadd.f32 0.0, %v703
        %705 = vmatprep.mubr.bf16.mxu0 %v542
        %706 = vmatmul.mubr.bf16.gmra.mrb[0].mxu0 %v541
        %v707 = vpop.f32.mrb[0].mxu0
        %v708 = vadd.f32 0.0, %v707
        %v709 = vpop.f32.mrb[0].mxu0
        %v710 = vadd.f32 0.0, %v709
        %v711 = vpop.f32.mrb[0].mxu0
        %v712 = vadd.f32 0.0, %v711
        %v713 = vpop.f32.mrb[0].mxu0
        %v714 = vadd.f32 0.0, %v713
        %715 = vmatprep.mubr.bf16.mxu0 %v545
        %716 = vmatmul.mubr.bf16.gmra.mrb[0].mxu0 %v544
        %v717 = vpop.f32.mrb[0].mxu0
        %v718 = vadd.f32 0.0, %v717
        %v719 = vpop.f32.mrb[0].mxu0
        %v720 = vadd.f32 0.0, %v719
        %v721 = vpop.f32.mrb[0].mxu0
        %v722 = vadd.f32 0.0, %v721
        %v723 = vpop.f32.mrb[0].mxu0
        %v724 = vadd.f32 0.0, %v723
        %725 = vmatprep.mubr.bf16.mxu0 %v548
        %726 = vmatmul.mubr.bf16.gmra.mrb[0].mxu0 %v547
        %v727 = vpop.f32.mrb[0].mxu0
        %v728 = vadd.f32 0.0, %v727
        %v729 = vpop.f32.mrb[0].mxu0
        %v730 = vadd.f32 0.0, %v729
        %v731 = vpop.f32.mrb[0].mxu0
        %v732 = vadd.f32 0.0, %v731
        %v733 = vpop.f32.mrb[0].mxu0
        %v734 = vadd.f32 0.0, %v733
        %735 = vmatprep.mubr.bf16.mxu0 %v551
        %736 = vmatmul.mubr.bf16.gmra.mrb[0].mxu0 %v550
        %v737 = vpop.f32.mrb[0].mxu0
        %v738 = vadd.f32 0.0, %v737
        %v739 = vpop.f32.mrb[0].mxu0
        %v740 = vadd.f32 0.0, %v739
        %v741 = vpop.f32.mrb[0].mxu0
        %v742 = vadd.f32 0.0, %v741
        %v743 = vpop.f32.mrb[0].mxu0
        %v744 = vadd.f32 0.0, %v743
        %745 = vdwg.mxu0
        %746 = vmatprep.subr.bf16.mxu0 %v394
        %747 = vmatpush1.bf16.msra.mxu0 %v393
        %748 = vmatprep.subr.bf16.mxu0 %v396
        %749 = vmatpush1.bf16.msra.mxu0 %v395
        %750 = vmatprep.subr.bf16.mxu0 %v398
        %751 = vmatpush1.bf16.msra.mxu0 %v397
        %752 = vmatprep.subr.bf16.mxu0 %v400
        %753 = vmatpush1.bf16.msra.mxu0 %v399
        %754 = vmatprep.subr.bf16.mxu0 %v402
        %755 = vmatpush1.bf16.msra.mxu0 %v401
        %756 = vmatprep.subr.bf16.mxu0 %v404
        %757 = vmatpush1.bf16.msra.mxu0 %v403
        %758 = vmatprep.subr.bf16.mxu0 %v406
        %759 = vmatpush1.bf16.msra.mxu0 %v405
        %760 = vmatprep.subr.bf16.mxu0 %v408
        %761 = vmatpush1.bf16.msra.mxu0 %v407
        %762 = vmatprep.subr.bf16.mxu0 0
        %763 = vmatpush1.bf16.msra.mxu0 0
        %764 = vmatprep.subr.bf16.mxu0 0
        %765 = vmatpush1.bf16.msra.mxu0 0
        %766 = vmatprep.subr.bf16.mxu0 0
        %767 = vmatpush1.bf16.msra.mxu0 0
        %768 = vmatprep.subr.bf16.mxu0 0
        %769 = vmatpush1.bf16.msra.mxu0 0
        %770 = vmatprep.subr.bf16.mxu0 0
        %771 = vmatpush1.bf16.msra.mxu0 0
        %772 = vmatprep.subr.bf16.mxu0 0
        %773 = vmatpush1.bf16.msra.mxu0 0
        %774 = vmatprep.subr.bf16.mxu0 0
        %775 = vmatpush1.bf16.msra.mxu0 0
        %776 = vmatprep.subr.bf16.mxu0 0
        %777 = vmatpush1.bf16.msra.mxu0 0
        %778 = vmatprep.mubr.bf16.mxu0 0
        %779 = vmatmul.mubr.bf16.gmra.mrb[0].mxu0 %v507
        %v780 = vpop.f32.mrb[0].mxu0
        %v781 = vadd.f32 %v588, %v780
        %v782 = vpop.f32.mrb[0].mxu0
        %v783 = vadd.f32 %v590, %v782
        %v784 = vpop.f32.mrb[0].mxu0
        %v785 = vadd.f32 %v592, %v784
        %v786 = vpop.f32.mrb[0].mxu0
        %v787 = vadd.f32 %v594, %v786
        %788 = vmatprep.mubr.bf16.mxu0 0
        %789 = vmatmul.mubr.bf16.gmra.mrb[0].mxu0 %v510
        %v790 = vpop.f32.mrb[0].mxu0
        %v791 = vadd.f32 %v598, %v790
        %v792 = vpop.f32.mrb[0].mxu0
        %v793 = vadd.f32 %v600, %v792
        %v794 = vpop.f32.mrb[0].mxu0
        %v795 = vadd.f32 %v602, %v794
        %v796 = vpop.f32.mrb[0].mxu0
        %v797 = vadd.f32 %v604, %v796
        %798 = vmatprep.mubr.bf16.mxu0 0
        %799 = vmatmul.mubr.bf16.gmra.mrb[0].mxu0 %v513
        %v800 = vpop.f32.mrb[0].mxu0
        %v801 = vadd.f32 %v608, %v800
        %v802 = vpop.f32.mrb[0].mxu0
        %v803 = vadd.f32 %v610, %v802
        %v804 = vpop.f32.mrb[0].mxu0
        %v805 = vadd.f32 %v612, %v804
        %v806 = vpop.f32.mrb[0].mxu0
        %v807 = vadd.f32 %v614, %v806
        %808 = vmatprep.mubr.bf16.mxu0 0
        %809 = vmatmul.mubr.bf16.gmra.mrb[0].mxu0 %v516
        %v810 = vpop.f32.mrb[0].mxu0
        %v811 = vadd.f32 %v618, %v810
        %v812 = vpop.f32.mrb[0].mxu0
        %v813 = vadd.f32 %v620, %v812
        %v814 = vpop.f32.mrb[0].mxu0
        %v815 = vadd.f32 %v622, %v814
        %v816 = vpop.f32.mrb[0].mxu0
        %v817 = vadd.f32 %v624, %v816
        %818 = vmatprep.mubr.bf16.mxu0 0
        %819 = vmatmul.mubr.bf16.gmra.mrb[0].mxu0 %v519
        %v820 = vpop.f32.mrb[0].mxu0
        %v821 = vadd.f32 %v628, %v820
        %v822 = vpop.f32.mrb[0].mxu0
        %v823 = vadd.f32 %v630, %v822
        %v824 = vpop.f32.mrb[0].mxu0
        %v825 = vadd.f32 %v632, %v824
        %v826 = vpop.f32.mrb[0].mxu0
        %v827 = vadd.f32 %v634, %v826
        %828 = vmatprep.mubr.bf16.mxu0 0
        %829 = vmatmul.mubr.bf16.gmra.mrb[0].mxu0 %v522
        %v830 = vpop.f32.mrb[0].mxu0
        %v831 = vadd.f32 %v638, %v830
        %v832 = vpop.f32.mrb[0].mxu0
        %v833 = vadd.f32 %v640, %v832
        %v834 = vpop.f32.mrb[0].mxu0
        %v835 = vadd.f32 %v642, %v834
        %v836 = vpop.f32.mrb[0].mxu0
        %v837 = vadd.f32 %v644, %v836
        %838 = vmatprep.mubr.bf16.mxu0 0
        %839 = vmatmul.mubr.bf16.gmra.mrb[0].mxu0 %v525
        %v840 = vpop.f32.mrb[0].mxu0
        %v841 = vadd.f32 %v648, %v840
        %v842 = vpop.f32.mrb[0].mxu0
        %v843 = vadd.f32 %v650, %v842
        %v844 = vpop.f32.mrb[0].mxu0
        %v845 = vadd.f32 %v652, %v844
        %v846 = vpop.f32.mrb[0].mxu0
        %v847 = vadd.f32 %v654, %v846
        %848 = vmatprep.mubr.bf16.mxu0 0
        %849 = vmatmul.mubr.bf16.gmra.mrb[0].mxu0 %v528
        %v850 = vpop.f32.mrb[0].mxu0
        %v851 = vadd.f32 %v658, %v850
        %v852 = vpop.f32.mrb[0].mxu0
        %v853 = vadd.f32 %v660, %v852
        %v854 = vpop.f32.mrb[0].mxu0
        %v855 = vadd.f32 %v662, %v854
        %v856 = vpop.f32.mrb[0].mxu0
        %v857 = vadd.f32 %v664, %v856
        %858 = vmatprep.mubr.bf16.mxu0 0
        %859 = vmatmul.mubr.bf16.gmra.mrb[0].mxu0 %v531
        %v860 = vpop.f32.mrb[0].mxu0
        %v861 = vadd.f32 %v668, %v860
        %v862 = vpop.f32.mrb[0].mxu0
        %v863 = vadd.f32 %v670, %v862
        %v864 = vpop.f32.mrb[0].mxu0
        %v865 = vadd.f32 %v672, %v864
        %v866 = vpop.f32.mrb[0].mxu0
        %v867 = vadd.f32 %v674, %v866
        %868 = vmatprep.mubr.bf16.mxu0 0
        %869 = vmatmul.mubr.bf16.gmra.mrb[0].mxu0 %v534
        %v870 = vpop.f32.mrb[0].mxu0
        %v871 = vadd.f32 %v678, %v870
        %v872 = vpop.f32.mrb[0].mxu0
        %v873 = vadd.f32 %v680, %v872
        %v874 = vpop.f32.mrb[0].mxu0
        %v875 = vadd.f32 %v682, %v874
        %v876 = vpop.f32.mrb[0].mxu0
        %v877 = vadd.f32 %v684, %v876
        %878 = vmatprep.mubr.bf16.mxu0 0
        %879 = vmatmul.mubr.bf16.gmra.mrb[0].mxu0 %v537
        %v880 = vpop.f32.mrb[0].mxu0
        %v881 = vadd.f32 %v688, %v880
        %v882 = vpop.f32.mrb[0].mxu0
        %v883 = vadd.f32 %v690, %v882
        %v884 = vpop.f32.mrb[0].mxu0
        %v885 = vadd.f32 %v692, %v884
        %v886 = vpop.f32.mrb[0].mxu0
        %v887 = vadd.f32 %v694, %v886
        %888 = vmatprep.mubr.bf16.mxu0 0
        %889 = vmatmul.mubr.bf16.gmra.mrb[0].mxu0 %v540
        %v890 = vpop.f32.mrb[0].mxu0
        %v891 = vadd.f32 %v698, %v890
        %v892 = vpop.f32.mrb[0].mxu0
        %v893 = vadd.f32 %v700, %v892
        %v894 = vpop.f32.mrb[0].mxu0
        %v895 = vadd.f32 %v702, %v894
        %v896 = vpop.f32.mrb[0].mxu0
        %v897 = vadd.f32 %v704, %v896
        %898 = vmatprep.mubr.bf16.mxu0 0
        %899 = vmatmul.mubr.bf16.gmra.mrb[0].mxu0 %v543
        %v900 = vpop.f32.mrb[0].mxu0
        %v901 = vadd.f32 %v708, %v900
        %v902 = vpop.f32.mrb[0].mxu0
        %v903 = vadd.f32 %v710, %v902
        %v904 = vpop.f32.mrb[0].mxu0
        %v905 = vadd.f32 %v712, %v904
        %v906 = vpop.f32.mrb[0].mxu0
        %v907 = vadd.f32 %v714, %v906
        %908 = vmatprep.mubr.bf16.mxu0 0
        %909 = vmatmul.mubr.bf16.gmra.mrb[0].mxu0 %v546
        %v910 = vpop.f32.mrb[0].mxu0
        %v911 = vadd.f32 %v718, %v910
        %v912 = vpop.f32.mrb[0].mxu0
        %v913 = vadd.f32 %v720, %v912
        %v914 = vpop.f32.mrb[0].mxu0
        %v915 = vadd.f32 %v722, %v914
        %v916 = vpop.f32.mrb[0].mxu0
        %v917 = vadd.f32 %v724, %v916
        %918 = vmatprep.mubr.bf16.mxu0 0
        %919 = vmatmul.mubr.bf16.gmra.mrb[0].mxu0 %v549
        %v920 = vpop.f32.mrb[0].mxu0
        %v921 = vadd.f32 %v728, %v920
        %v922 = vpop.f32.mrb[0].mxu0
        %v923 = vadd.f32 %v730, %v922
        %v924 = vpop.f32.mrb[0].mxu0
        %v925 = vadd.f32 %v732, %v924
        %v926 = vpop.f32.mrb[0].mxu0
        %v927 = vadd.f32 %v734, %v926
        %928 = vmatprep.mubr.bf16.mxu0 0
        %929 = vmatmul.mubr.bf16.gmra.mrb[0].mxu0 %v552
        %v930 = vpop.f32.mrb[0].mxu0
        %v931 = vadd.f32 %v738, %v930
        %v932 = vpop.f32.mrb[0].mxu0
        %v933 = vadd.f32 %v740, %v932
        %v934 = vpop.f32.mrb[0].mxu0
        %v935 = vadd.f32 %v742, %v934
        %v936 = vpop.f32.mrb[0].mxu0
        %v937 = vadd.f32 %v744, %v936
        %938 = vdwg.mxu0
        %v939 = vpack.c.bf16 %v785, %v781
        %v940 = vpack.c.bf16 %v787, %v783
        %v941 = vpack.c.bf16 %v795, %v791
        %v942 = vpack.c.bf16 %v797, %v793
        %v943 = vpack.c.bf16 %v805, %v801
        %v944 = vpack.c.bf16 %v807, %v803
        %v945 = vpack.c.bf16 %v815, %v811
        %v946 = vpack.c.bf16 %v817, %v813
        %v947 = vpack.c.bf16 %v825, %v821
        %v948 = vpack.c.bf16 %v827, %v823
        %v949 = vpack.c.bf16 %v835, %v831
        %v950 = vpack.c.bf16 %v837, %v833
        %v951 = vpack.c.bf16 %v845, %v841
        %v952 = vpack.c.bf16 %v847, %v843
        %v953 = vpack.c.bf16 %v855, %v851
        %v954 = vpack.c.bf16 %v857, %v853
        %v955 = vpack.c.bf16 %v865, %v861
        %v956 = vpack.c.bf16 %v867, %v863
        %v957 = vpack.c.bf16 %v875, %v871
        %v958 = vpack.c.bf16 %v877, %v873
        %v959 = vpack.c.bf16 %v885, %v881
        %v960 = vpack.c.bf16 %v887, %v883
        %v961 = vpack.c.bf16 %v895, %v891
        %v962 = vpack.c.bf16 %v897, %v893
        %v963 = vpack.c.bf16 %v905, %v901
        %v964 = vpack.c.bf16 %v907, %v903
        %v965 = vpack.c.bf16 %v915, %v911
        %v966 = vpack.c.bf16 %v917, %v913
        %v967 = vpack.c.bf16 %v925, %v921
        %v968 = vpack.c.bf16 %v927, %v923
        %v969 = vpack.c.bf16 %v935, %v931
        %v970 = vpack.c.bf16 %v937, %v933
        %s971 = smul.u32 %s25, 128
        %s972 = sshra.s32 %s971, 3
        %s973 = sand.u32 %s971, 7
        %s974 = smul.u32 %s972, 3
        %s975 = smul.addr %s974, 8
        %s976 = scalar_lea.vmem %s166, %s975 [#allocation2]
        %v977 = vld [vmem:[%s976] sm:$0xff]
        %v978 = vld [vmem:[%s976 + $0x8] sm:$0xff]
        %v979 = vld [vmem:[%s976 + $0x10] sm:$0xff]
        %v980 = vld [vmem:[%s976 + $0x18] sm:$0xff]
        %v981 = vld [vmem:[%s976 + $0x20] sm:$0xff]
        %v982 = vld [vmem:[%s976 + $0x28] sm:$0xff]
        %v983 = vld [vmem:[%s976 + $0x30] sm:$0xff]
        %v984 = vld [vmem:[%s976 + $0x38] sm:$0xff]
        %v985 = vld [vmem:[%s976 + $0x40] sm:$0xff]
        %v986 = vld [vmem:[%s976 + $0x48] sm:$0xff]
        %v987 = vld [vmem:[%s976 + $0x50] sm:$0xff]
        %v988 = vld [vmem:[%s976 + $0x58] sm:$0xff]
        %v989 = vld [vmem:[%s976 + $0x60] sm:$0xff]
        %v990 = vld [vmem:[%s976 + $0x68] sm:$0xff]
        %v991 = vld [vmem:[%s976 + $0x70] sm:$0xff]
        %v992 = vld [vmem:[%s976 + $0x78] sm:$0xff]
        %v993 = vld [vmem:[%s976 + $0x80] sm:$0xff]
        %v994 = vld [vmem:[%s976 + $0x88] sm:$0xff]
        %v995 = vld [vmem:[%s976 + $0x90] sm:$0xff]
        %v996 = vld [vmem:[%s976 + $0x98] sm:$0xff]
        %v997 = vld [vmem:[%s976 + $0xa0] sm:$0xff]
        %v998 = vld [vmem:[%s976 + $0xa8] sm:$0xff]
        %v999 = vld [vmem:[%s976 + $0xb0] sm:$0xff]
        %v1000 = vld [vmem:[%s976 + $0xb8] sm:$0xff]
        %v1001 = vld [vmem:[%s976 + $0xc0] sm:$0xff]
        %v1002 = vld [vmem:[%s976 + $0xc8] sm:$0xff]
        %v1003 = vld [vmem:[%s976 + $0xd0] sm:$0xff]
        %v1004 = vld [vmem:[%s976 + $0xd8] sm:$0xff]
        %v1005 = vld [vmem:[%s976 + $0xe0] sm:$0xff]
        %v1006 = vld [vmem:[%s976 + $0xe8] sm:$0xff]
        %v1007 = vld [vmem:[%s976 + $0xf0] sm:$0xff]
        %v1008 = vld [vmem:[%s976 + $0xf8] sm:$0xff]
        %v1009 = vld [vmem:[%s976 + $0x100] sm:$0xff]
        %v1010 = vld [vmem:[%s976 + $0x108] sm:$0xff]
        %v1011 = vld [vmem:[%s976 + $0x110] sm:$0xff]
        %v1012 = vld [vmem:[%s976 + $0x118] sm:$0xff]
        %v1013 = vld [vmem:[%s976 + $0x120] sm:$0xff]
        %v1014 = vld [vmem:[%s976 + $0x128] sm:$0xff]
        %v1015 = vld [vmem:[%s976 + $0x130] sm:$0xff]
        %v1016 = vld [vmem:[%s976 + $0x138] sm:$0xff]
        %v1017 = vld [vmem:[%s976 + $0x140] sm:$0xff]
        %v1018 = vld [vmem:[%s976 + $0x148] sm:$0xff]
        %v1019 = vld [vmem:[%s976 + $0x150] sm:$0xff]
        %v1020 = vld [vmem:[%s976 + $0x158] sm:$0xff]
        %v1021 = vld [vmem:[%s976 + $0x160] sm:$0xff]
        %v1022 = vld [vmem:[%s976 + $0x168] sm:$0xff]
        %v1023 = vld [vmem:[%s976 + $0x170] sm:$0xff]
        %v1024 = vld [vmem:[%s976 + $0x178] sm:$0xff]
        %v1025 = vpack.c.bf16 %v980, %v977
        %v1026 = vpack.c.bf16 %v981, %v978
        %v1027 = vpack.c.bf16 %v982, %v979
        %v1028 = vpack.c.bf16 %v986, %v983
        %v1029 = vpack.c.bf16 %v987, %v984
        %v1030 = vpack.c.bf16 %v988, %v985
        %v1031 = vpack.c.bf16 %v992, %v989
        %v1032 = vpack.c.bf16 %v993, %v990
        %v1033 = vpack.c.bf16 %v994, %v991
        %v1034 = vpack.c.bf16 %v998, %v995
        %v1035 = vpack.c.bf16 %v999, %v996
        %v1036 = vpack.c.bf16 %v1000, %v997
        %v1037 = vpack.c.bf16 %v1004, %v1001
        %v1038 = vpack.c.bf16 %v1005, %v1002
        %v1039 = vpack.c.bf16 %v1006, %v1003
        %v1040 = vpack.c.bf16 %v1010, %v1007
        %v1041 = vpack.c.bf16 %v1011, %v1008
        %v1042 = vpack.c.bf16 %v1012, %v1009
        %v1043 = vpack.c.bf16 %v1016, %v1013
        %v1044 = vpack.c.bf16 %v1017, %v1014
        %v1045 = vpack.c.bf16 %v1018, %v1015
        %v1046 = vpack.c.bf16 %v1022, %v1019
        %v1047 = vpack.c.bf16 %v1023, %v1020
        %v1048 = vpack.c.bf16 %v1024, %v1021
        %1049 = vmatprep.subr.bf16.mxu0 0
        %1050 = vmatpush1.bf16.msra.mxu0 %v337
        %1051 = vmatprep.subr.bf16.mxu0 0
        %1052 = vmatpush1.bf16.msra.mxu0 %v338
        %1053 = vmatprep.subr.bf16.mxu0 0
        %1054 = vmatpush1.bf16.msra.mxu0 %v339
        %1055 = vmatprep.subr.bf16.mxu0 0
        %1056 = vmatpush1.bf16.msra.mxu0 %v340
        %1057 = vmatprep.subr.bf16.mxu0 0
        %1058 = vmatpush1.bf16.msra.mxu0 %v341
        %1059 = vmatprep.subr.bf16.mxu0 0
        %1060 = vmatpush1.bf16.msra.mxu0 %v342
        %1061 = vmatprep.subr.bf16.mxu0 0
        %1062 = vmatpush1.bf16.msra.mxu0 %v343
        %1063 = vmatprep.subr.bf16.mxu0 0
        %1064 = vmatpush1.bf16.msra.mxu0 %v344
        %1065 = vmatprep.subr.bf16.mxu0 0
        %1066 = vmatpush1.bf16.msra.mxu0 %v345
        %1067 = vmatprep.subr.bf16.mxu0 0
        %1068 = vmatpush1.bf16.msra.mxu0 %v346
        %1069 = vmatprep.subr.bf16.mxu0 0
        %1070 = vmatpush1.bf16.msra.mxu0 %v347
        %1071 = vmatprep.subr.bf16.mxu0 0
        %1072 = vmatpush1.bf16.msra.mxu0 %v348
        %1073 = vmatprep.subr.bf16.mxu0 0
        %1074 = vmatpush1.bf16.msra.mxu0 %v349
        %1075 = vmatprep.subr.bf16.mxu0 0
        %1076 = vmatpush1.bf16.msra.mxu0 %v350
        %1077 = vmatprep.subr.bf16.mxu0 0
        %1078 = vmatpush1.bf16.msra.mxu0 %v351
        %1079 = vmatprep.subr.bf16.mxu0 0
        %1080 = vmatpush1.bf16.msra.mxu0 %v352
        %1081 = vmatprep.mubr.bf16.mxu0 %v1026
        %1082 = vmatmul.mubr.bf16.gmra.mrb[0].mxu0 %v1025
        %v1083 = vpop.f32.mrb[0].mxu0
        %v1084 = vadd.f32 0.0, %v1083
        %v1085 = vpop.f32.mrb[0].mxu0
        %v1086 = vpop.f32.mrb[0].mxu0
        %v1087 = vadd.f32 0.0, %v1086
        %v1088 = vpop.f32.mrb[0].mxu0
        %1089 = vmatprep.mubr.bf16.mxu0 %v1029
        %1090 = vmatmul.mubr.bf16.gmra.mrb[0].mxu0 %v1028
        %v1091 = vpop.f32.mrb[0].mxu0
        %v1092 = vadd.f32 0.0, %v1091
        %v1093 = vpop.f32.mrb[0].mxu0
        %v1094 = vpop.f32.mrb[0].mxu0
        %v1095 = vadd.f32 0.0, %v1094
        %v1096 = vpop.f32.mrb[0].mxu0
        %1097 = vmatprep.mubr.bf16.mxu0 %v1032
        %1098 = vmatmul.mubr.bf16.gmra.mrb[0].mxu0 %v1031
        %v1099 = vpop.f32.mrb[0].mxu0
        %v1100 = vadd.f32 0.0, %v1099
        %v1101 = vpop.f32.mrb[0].mxu0
        %v1102 = vpop.f32.mrb[0].mxu0
        %v1103 = vadd.f32 0.0, %v1102
        %v1104 = vpop.f32.mrb[0].mxu0
        %1105 = vmatprep.mubr.bf16.mxu0 %v1035
        %1106 = vmatmul.mubr.bf16.gmra.mrb[0].mxu0 %v1034
        %v1107 = vpop.f32.mrb[0].mxu0
        %v1108 = vadd.f32 0.0, %v1107
        %v1109 = vpop.f32.mrb[0].mxu0
        %v1110 = vpop.f32.mrb[0].mxu0
        %v1111 = vadd.f32 0.0, %v1110
        %v1112 = vpop.f32.mrb[0].mxu0
        %1113 = vmatprep.mubr.bf16.mxu0 %v1038
        %1114 = vmatmul.mubr.bf16.gmra.mrb[0].mxu0 %v1037
        %v1115 = vpop.f32.mrb[0].mxu0
        %v1116 = vadd.f32 0.0, %v1115
        %v1117 = vpop.f32.mrb[0].mxu0
        %v1118 = vpop.f32.mrb[0].mxu0
        %v1119 = vadd.f32 0.0, %v1118
        %v1120 = vpop.f32.mrb[0].mxu0
        %1121 = vmatprep.mubr.bf16.mxu0 %v1041
        %1122 = vmatmul.mubr.bf16.gmra.mrb[0].mxu0 %v1040
        %v1123 = vpop.f32.mrb[0].mxu0
        %v1124 = vadd.f32 0.0, %v1123
        %v1125 = vpop.f32.mrb[0].mxu0
        %v1126 = vpop.f32.mrb[0].mxu0
        %v1127 = vadd.f32 0.0, %v1126
        %v1128 = vpop.f32.mrb[0].mxu0
        %1129 = vmatprep.mubr.bf16.mxu0 %v1044
        %1130 = vmatmul.mubr.bf16.gmra.mrb[0].mxu0 %v1043
        %v1131 = vpop.f32.mrb[0].mxu0
        %v1132 = vadd.f32 0.0, %v1131
        %v1133 = vpop.f32.mrb[0].mxu0
        %v1134 = vpop.f32.mrb[0].mxu0
        %v1135 = vadd.f32 0.0, %v1134
        %v1136 = vpop.f32.mrb[0].mxu0
        %1137 = vmatprep.mubr.bf16.mxu0 %v1047
        %1138 = vmatmul.mubr.bf16.gmra.mrb[0].mxu0 %v1046
        %v1139 = vpop.f32.mrb[0].mxu0
        %v1140 = vadd.f32 0.0, %v1139
        %v1141 = vpop.f32.mrb[0].mxu0
        %v1142 = vpop.f32.mrb[0].mxu0
        %v1143 = vadd.f32 0.0, %v1142
        %v1144 = vpop.f32.mrb[0].mxu0
        %1145 = vdwg.mxu0
        %1146 = vmatprep.subr.bf16.mxu0 0
        %1147 = vmatpush1.bf16.msra.mxu0 %v353
        %1148 = vmatprep.subr.bf16.mxu0 0
        %1149 = vmatpush1.bf16.msra.mxu0 %v354
        %1150 = vmatprep.subr.bf16.mxu0 0
        %1151 = vmatpush1.bf16.msra.mxu0 %v355
        %1152 = vmatprep.subr.bf16.mxu0 0
        %1153 = vmatpush1.bf16.msra.mxu0 %v356
        %1154 = vmatprep.subr.bf16.mxu0 0
        %1155 = vmatpush1.bf16.msra.mxu0 %v357
        %1156 = vmatprep.subr.bf16.mxu0 0
        %1157 = vmatpush1.bf16.msra.mxu0 %v358
        %1158 = vmatprep.subr.bf16.mxu0 0
        %1159 = vmatpush1.bf16.msra.mxu0 %v359
        %1160 = vmatprep.subr.bf16.mxu0 0
        %1161 = vmatpush1.bf16.msra.mxu0 %v360
        %1162 = vmatprep.subr.bf16.mxu0 0
        %1163 = vmatpush1.bf16.msra.mxu0 0
        %1164 = vmatprep.subr.bf16.mxu0 0
        %1165 = vmatpush1.bf16.msra.mxu0 0
        %1166 = vmatprep.subr.bf16.mxu0 0
        %1167 = vmatpush1.bf16.msra.mxu0 0
        %1168 = vmatprep.subr.bf16.mxu0 0
        %1169 = vmatpush1.bf16.msra.mxu0 0
        %1170 = vmatprep.subr.bf16.mxu0 0
        %1171 = vmatpush1.bf16.msra.mxu0 0
        %1172 = vmatprep.subr.bf16.mxu0 0
        %1173 = vmatpush1.bf16.msra.mxu0 0
        %1174 = vmatprep.subr.bf16.mxu0 0
        %1175 = vmatpush1.bf16.msra.mxu0 0
        %1176 = vmatprep.subr.bf16.mxu0 0
        %1177 = vmatpush1.bf16.msra.mxu0 0
        %1178 = vmatprep.mubr.bf16.mxu0 0
        %1179 = vmatmul.mubr.bf16.gmra.mrb[0].mxu0 %v1027
        %v1180 = vpop.f32.mrb[0].mxu0
        %v1181 = vadd.f32 %v1084, %v1180
        %v1182 = vpop.f32.mrb[0].mxu0
        %v1183 = vpop.f32.mrb[0].mxu0
        %v1184 = vadd.f32 %v1087, %v1183
        %v1185 = vpop.f32.mrb[0].mxu0
        %1186 = vmatprep.mubr.bf16.mxu0 0
        %1187 = vmatmul.mubr.bf16.gmra.mrb[0].mxu0 %v1030
        %v1188 = vpop.f32.mrb[0].mxu0
        %v1189 = vadd.f32 %v1092, %v1188
        %v1190 = vpop.f32.mrb[0].mxu0
        %v1191 = vpop.f32.mrb[0].mxu0
        %v1192 = vadd.f32 %v1095, %v1191
        %v1193 = vpop.f32.mrb[0].mxu0
        %1194 = vmatprep.mubr.bf16.mxu0 0
        %1195 = vmatmul.mubr.bf16.gmra.mrb[0].mxu0 %v1033
        %v1196 = vpop.f32.mrb[0].mxu0
        %v1197 = vadd.f32 %v1100, %v1196
        %v1198 = vpop.f32.mrb[0].mxu0
        %v1199 = vpop.f32.mrb[0].mxu0
        %v1200 = vadd.f32 %v1103, %v1199
        %v1201 = vpop.f32.mrb[0].mxu0
        %1202 = vmatprep.mubr.bf16.mxu0 0
        %1203 = vmatmul.mubr.bf16.gmra.mrb[0].mxu0 %v1036
        %v1204 = vpop.f32.mrb[0].mxu0
        %v1205 = vadd.f32 %v1108, %v1204
        %v1206 = vpop.f32.mrb[0].mxu0
        %v1207 = vpop.f32.mrb[0].mxu0
        %v1208 = vadd.f32 %v1111, %v1207
        %v1209 = vpop.f32.mrb[0].mxu0
        %1210 = vmatprep.mubr.bf16.mxu0 0
        %1211 = vmatmul.mubr.bf16.gmra.mrb[0].mxu0 %v1039
        %v1212 = vpop.f32.mrb[0].mxu0
        %v1213 = vadd.f32 %v1116, %v1212
        %v1214 = vpop.f32.mrb[0].mxu0
        %v1215 = vpop.f32.mrb[0].mxu0
        %v1216 = vadd.f32 %v1119, %v1215
        %v1217 = vpop.f32.mrb[0].mxu0
        %1218 = vmatprep.mubr.bf16.mxu0 0
        %1219 = vmatmul.mubr.bf16.gmra.mrb[0].mxu0 %v1042
        %v1220 = vpop.f32.mrb[0].mxu0
        %v1221 = vadd.f32 %v1124, %v1220
        %v1222 = vpop.f32.mrb[0].mxu0
        %v1223 = vpop.f32.mrb[0].mxu0
        %v1224 = vadd.f32 %v1127, %v1223
        %v1225 = vpop.f32.mrb[0].mxu0
        %1226 = vmatprep.mubr.bf16.mxu0 0
        %1227 = vmatmul.mubr.bf16.gmra.mrb[0].mxu0 %v1045
        %v1228 = vpop.f32.mrb[0].mxu0
        %v1229 = vadd.f32 %v1132, %v1228
        %v1230 = vpop.f32.mrb[0].mxu0
        %v1231 = vpop.f32.mrb[0].mxu0
        %v1232 = vadd.f32 %v1135, %v1231
        %v1233 = vpop.f32.mrb[0].mxu0
        %1234 = vmatprep.mubr.bf16.mxu0 0
        %1235 = vmatmul.mubr.bf16.gmra.mrb[0].mxu0 %v1048
        %v1236 = vpop.f32.mrb[0].mxu0
        %v1237 = vadd.f32 %v1140, %v1236
        %v1238 = vpop.f32.mrb[0].mxu0
        %v1239 = vpop.f32.mrb[0].mxu0
        %v1240 = vadd.f32 %v1143, %v1239
        %v1241 = vpop.f32.mrb[0].mxu0
        %1242 = vdwg.mxu0
        %v1243 = vmul.f32 %v1181, 0.05103104
        %v1244 = vmul.f32 %v1184, 0.05103104
        %v1245 = vmul.f32 %v1189, 0.05103104
        %v1246 = vmul.f32 %v1192, 0.05103104
        %v1247 = vmul.f32 %v1197, 0.05103104
        %v1248 = vmul.f32 %v1200, 0.05103104
        %v1249 = vmul.f32 %v1205, 0.05103104
        %v1250 = vmul.f32 %v1208, 0.05103104
        %v1251 = vmul.f32 %v1213, 0.05103104
        %v1252 = vmul.f32 %v1216, 0.05103104
        %v1253 = vmul.f32 %v1221, 0.05103104
        %v1254 = vmul.f32 %v1224, 0.05103104
        %v1255 = vmul.f32 %v1229, 0.05103104
        %v1256 = vmul.f32 %v1232, 0.05103104
        %v1257 = vmul.f32 %v1237, 0.05103104
        %v1258 = vmul.f32 %v1240, 0.05103104
        %v1259 = vpack.c.bf16 %v1244, %v1243
        %v1260 = vpack.c.bf16 %v1246, %v1245
        %v1261 = vpack.c.bf16 %v1248, %v1247
        %v1262 = vpack.c.bf16 %v1250, %v1249
        %v1263 = vpack.c.bf16 %v1252, %v1251
        %v1264 = vpack.c.bf16 %v1254, %v1253
        %v1265 = vpack.c.bf16 %v1256, %v1255
        %v1266 = vpack.c.bf16 %v1258, %v1257
        %1267 = vmatprep.subr.bf16.mxu0 0
        %1268 = vmatpush1.bf16.xpose.msra.mxu0 %v939
        %1269 = vmatprep.subr.bf16.mxu0 0
        %1270 = vmatpush1.bf16.xpose.msra.mxu0 %v941
        %1271 = vmatprep.subr.bf16.mxu0 0
        %1272 = vmatpush1.bf16.xpose.msra.mxu0 %v943
        %1273 = vmatprep.subr.bf16.mxu0 0
        %1274 = vmatpush1.bf16.xpose.msra.mxu0 %v945
        %1275 = vmatprep.subr.bf16.mxu0 0
        %1276 = vmatpush1.bf16.xpose.msra.mxu0 %v947
        %1277 = vmatprep.subr.bf16.mxu0 0
        %1278 = vmatpush1.bf16.xpose.msra.mxu0 %v949
        %1279 = vmatprep.subr.bf16.mxu0 0
        %1280 = vmatpush1.bf16.xpose.msra.mxu0 %v951
        %1281 = vmatprep.subr.bf16.mxu0 0
        %1282 = vmatpush1.bf16.xpose.msra.mxu0 %v953
        %1283 = vmatprep.subr.bf16.mxu0 0
        %1284 = vmatpush1.bf16.xpose.msra.mxu0 %v955
        %1285 = vmatprep.subr.bf16.mxu0 0
        %1286 = vmatpush1.bf16.xpose.msra.mxu0 %v957
        %1287 = vmatprep.subr.bf16.mxu0 0
        %1288 = vmatpush1.bf16.xpose.msra.mxu0 %v959
        %1289 = vmatprep.subr.bf16.mxu0 0
        %1290 = vmatpush1.bf16.xpose.msra.mxu0 %v961
        %1291 = vmatprep.subr.bf16.mxu0 0
        %1292 = vmatpush1.bf16.xpose.msra.mxu0 %v963
        %1293 = vmatprep.subr.bf16.mxu0 0
        %1294 = vmatpush1.bf16.xpose.msra.mxu0 %v965
        %1295 = vmatprep.subr.bf16.mxu0 0
        %1296 = vmatpush1.bf16.xpose.msra.mxu0 %v967
        %1297 = vmatprep.subr.bf16.mxu0 0
        %1298 = vmatpush1.bf16.xpose.msra.mxu0 %v969
        %1299 = vmatprep.mubr.bf16.mxu0 0
        %1300 = vmatmul.mubr.bf16.gmra.mrb[0].mxu0 %v1259
        %v1301 = vpop.f32.mrb[0].mxu0
        %v1302 = vadd.f32 0.0, %v1301
        %v1303 = vpop.f32.mrb[0].mxu0
        %v1304 = vadd.f32 0.0, %v1303
        %v1305 = vpop.f32.mrb[0].mxu0
        %v1306 = vadd.f32 0.0, %v1305
        %v1307 = vpop.f32.mrb[0].mxu0
        %v1308 = vadd.f32 0.0, %v1307
        %1309 = vmatprep.mubr.bf16.mxu0 0
        %1310 = vmatmul.mubr.bf16.gmra.mrb[0].mxu0 %v1260
        %v1311 = vpop.f32.mrb[0].mxu0
        %v1312 = vadd.f32 0.0, %v1311
        %v1313 = vpop.f32.mrb[0].mxu0
        %v1314 = vadd.f32 0.0, %v1313
        %v1315 = vpop.f32.mrb[0].mxu0
        %v1316 = vadd.f32 0.0, %v1315
        %v1317 = vpop.f32.mrb[0].mxu0
        %v1318 = vadd.f32 0.0, %v1317
        %1319 = vmatprep.mubr.bf16.mxu0 0
        %1320 = vmatmul.mubr.bf16.gmra.mrb[0].mxu0 %v1261
        %v1321 = vpop.f32.mrb[0].mxu0
        %v1322 = vadd.f32 0.0, %v1321
        %v1323 = vpop.f32.mrb[0].mxu0
        %v1324 = vadd.f32 0.0, %v1323
        %v1325 = vpop.f32.mrb[0].mxu0
        %v1326 = vadd.f32 0.0, %v1325
        %v1327 = vpop.f32.mrb[0].mxu0
        %v1328 = vadd.f32 0.0, %v1327
        %1329 = vmatprep.mubr.bf16.mxu0 0
        %1330 = vmatmul.mubr.bf16.gmra.mrb[0].mxu0 %v1262
        %v1331 = vpop.f32.mrb[0].mxu0
        %v1332 = vadd.f32 0.0, %v1331
        %v1333 = vpop.f32.mrb[0].mxu0
        %v1334 = vadd.f32 0.0, %v1333
        %v1335 = vpop.f32.mrb[0].mxu0
        %v1336 = vadd.f32 0.0, %v1335
        %v1337 = vpop.f32.mrb[0].mxu0
        %v1338 = vadd.f32 0.0, %v1337
        %1339 = vmatprep.mubr.bf16.mxu0 0
        %1340 = vmatmul.mubr.bf16.gmra.mrb[0].mxu0 %v1263
        %v1341 = vpop.f32.mrb[0].mxu0
        %v1342 = vadd.f32 0.0, %v1341
        %v1343 = vpop.f32.mrb[0].mxu0
        %v1344 = vadd.f32 0.0, %v1343
        %v1345 = vpop.f32.mrb[0].mxu0
        %v1346 = vadd.f32 0.0, %v1345
        %v1347 = vpop.f32.mrb[0].mxu0
        %v1348 = vadd.f32 0.0, %v1347
        %1349 = vmatprep.mubr.bf16.mxu0 0
        %1350 = vmatmul.mubr.bf16.gmra.mrb[0].mxu0 %v1264
        %v1351 = vpop.f32.mrb[0].mxu0
        %v1352 = vadd.f32 0.0, %v1351
        %v1353 = vpop.f32.mrb[0].mxu0
        %v1354 = vadd.f32 0.0, %v1353
        %v1355 = vpop.f32.mrb[0].mxu0
        %v1356 = vadd.f32 0.0, %v1355
        %v1357 = vpop.f32.mrb[0].mxu0
        %v1358 = vadd.f32 0.0, %v1357
        %1359 = vmatprep.mubr.bf16.mxu0 0
        %1360 = vmatmul.mubr.bf16.gmra.mrb[0].mxu0 %v1265
        %v1361 = vpop.f32.mrb[0].mxu0
        %v1362 = vadd.f32 0.0, %v1361
        %v1363 = vpop.f32.mrb[0].mxu0
        %v1364 = vadd.f32 0.0, %v1363
        %v1365 = vpop.f32.mrb[0].mxu0
        %v1366 = vadd.f32 0.0, %v1365
        %v1367 = vpop.f32.mrb[0].mxu0
        %v1368 = vadd.f32 0.0, %v1367
        %1369 = vmatprep.mubr.bf16.mxu0 0
        %1370 = vmatmul.mubr.bf16.gmra.mrb[0].mxu0 %v1266
        %v1371 = vpop.f32.mrb[0].mxu0
        %v1372 = vadd.f32 0.0, %v1371
        %v1373 = vpop.f32.mrb[0].mxu0
        %v1374 = vadd.f32 0.0, %v1373
        %v1375 = vpop.f32.mrb[0].mxu0
        %v1376 = vadd.f32 0.0, %v1375
        %v1377 = vpop.f32.mrb[0].mxu0
        %v1378 = vadd.f32 0.0, %v1377
        %1379 = vdwg.mxu0
        %v1380 = vlaneseq
        %v1381 = vshrl.u32 %v1380, 7
        %v1382 = vadd.s32 %v1381, 8
        %v1383 = vadd.s32 %v1381, 16
        %v1384 = vadd.s32 %v1381, 24
        %v1385 = vadd.s32 %v1381, 32
        %v1386 = vadd.s32 %v1381, 40
        %v1387 = vadd.s32 %v1381, 48
        %v1388 = vadd.s32 %v1381, 56
        %v1389 = vadd.s32 %v1381, 64
        %v1390 = vadd.s32 %v1381, 72
        %v1391 = vadd.s32 %v1381, 80
        %v1392 = vadd.s32 %v1381, 88
        %v1393 = vadd.s32 %v1381, 96
        %v1394 = vadd.s32 %v1381, 104
        %v1395 = vadd.s32 %v1381, 112
        %v1396 = vadd.s32 %v1381, 120
        %v1397 = vstv %s971
        %v1398 = vadd.s32 %v1397, %v1381
        %v1399 = vadd.s32 %v1397, %v1382
        %v1400 = vadd.s32 %v1397, %v1383
        %v1401 = vadd.s32 %v1397, %v1384
        %v1402 = vadd.s32 %v1397, %v1385
        %v1403 = vadd.s32 %v1397, %v1386
        %v1404 = vadd.s32 %v1397, %v1387
        %v1405 = vadd.s32 %v1397, %v1388
        %v1406 = vadd.s32 %v1397, %v1389
        %v1407 = vadd.s32 %v1397, %v1390
        %v1408 = vadd.s32 %v1397, %v1391
        %v1409 = vadd.s32 %v1397, %v1392
        %v1410 = vadd.s32 %v1397, %v1393
        %v1411 = vadd.s32 %v1397, %v1394
        %v1412 = vadd.s32 %v1397, %v1395
        %v1413 = vadd.s32 %v1397, %v1396
        %v1414 = vlaneseq
        %v1415 = vand.u32 %v1414, 127
        %v1416 = vadd.s32 %v1415, 128
        %vm1417 = vcmp.le.s32.totalorder %v1415, %v1398
        %vm1418 = vcmp.le.s32.totalorder %v1416, %v1398
        %vm1419 = vcmp.le.s32.totalorder %v1415, %v1399
        %vm1420 = vcmp.le.s32.totalorder %v1416, %v1399
        %vm1421 = vcmp.le.s32.totalorder %v1415, %v1400
        %vm1422 = vcmp.le.s32.totalorder %v1416, %v1400
        %vm1423 = vcmp.le.s32.totalorder %v1415, %v1401
        %vm1424 = vcmp.le.s32.totalorder %v1416, %v1401
        %vm1425 = vcmp.le.s32.totalorder %v1415, %v1402
        %vm1426 = vcmp.le.s32.totalorder %v1416, %v1402
        %vm1427 = vcmp.le.s32.totalorder %v1415, %v1403
        %vm1428 = vcmp.le.s32.totalorder %v1416, %v1403
        %vm1429 = vcmp.le.s32.totalorder %v1415, %v1404
        %vm1430 = vcmp.le.s32.totalorder %v1416, %v1404
        %vm1431 = vcmp.le.s32.totalorder %v1415, %v1405
        %vm1432 = vcmp.le.s32.totalorder %v1416, %v1405
        %vm1433 = vcmp.le.s32.totalorder %v1415, %v1406
        %vm1434 = vcmp.le.s32.totalorder %v1416, %v1406
        %vm1435 = vcmp.le.s32.totalorder %v1415, %v1407
        %vm1436 = vcmp.le.s32.totalorder %v1416, %v1407
        %vm1437 = vcmp.le.s32.totalorder %v1415, %v1408
        %vm1438 = vcmp.le.s32.totalorder %v1416, %v1408
        %vm1439 = vcmp.le.s32.totalorder %v1415, %v1409
        %vm1440 = vcmp.le.s32.totalorder %v1416, %v1409
        %vm1441 = vcmp.le.s32.totalorder %v1415, %v1410
        %vm1442 = vcmp.le.s32.totalorder %v1416, %v1410
        %vm1443 = vcmp.le.s32.totalorder %v1415, %v1411
        %vm1444 = vcmp.le.s32.totalorder %v1416, %v1411
        %vm1445 = vcmp.le.s32.totalorder %v1415, %v1412
        %vm1446 = vcmp.le.s32.totalorder %v1416, %v1412
        %vm1447 = vcmp.le.s32.totalorder %v1415, %v1413
        %vm1448 = vcmp.le.s32.totalorder %v1416, %v1413
        %v1449 = vsel %vm1417, %v1302, -1e+30
        %v1450 = vsel %vm1418, %v1304, -1e+30
        %v1451 = vsel %vm1419, %v1306, -1e+30
        %v1452 = vsel %vm1420, %v1308, -1e+30
        %v1453 = vsel %vm1421, %v1312, -1e+30
        %v1454 = vsel %vm1422, %v1314, -1e+30
        %v1455 = vsel %vm1423, %v1316, -1e+30
        %v1456 = vsel %vm1424, %v1318, -1e+30
        %v1457 = vsel %vm1425, %v1322, -1e+30
        %v1458 = vsel %vm1426, %v1324, -1e+30
        %v1459 = vsel %vm1427, %v1326, -1e+30
        %v1460 = vsel %vm1428, %v1328, -1e+30
        %v1461 = vsel %vm1429, %v1332, -1e+30
        %v1462 = vsel %vm1430, %v1334, -1e+30
        %v1463 = vsel %vm1431, %v1336, -1e+30
        %v1464 = vsel %vm1432, %v1338, -1e+30
        %v1465 = vsel %vm1433, %v1342, -1e+30
        %v1466 = vsel %vm1434, %v1344, -1e+30
        %v1467 = vsel %vm1435, %v1346, -1e+30
        %v1468 = vsel %vm1436, %v1348, -1e+30
        %v1469 = vsel %vm1437, %v1352, -1e+30
        %v1470 = vsel %vm1438, %v1354, -1e+30
        %v1471 = vsel %vm1439, %v1356, -1e+30
        %v1472 = vsel %vm1440, %v1358, -1e+30
        %v1473 = vsel %vm1441, %v1362, -1e+30
        %v1474 = vsel %vm1442, %v1364, -1e+30
        %v1475 = vsel %vm1443, %v1366, -1e+30
        %v1476 = vsel %vm1444, %v1368, -1e+30
        %v1477 = vsel %vm1445, %v1372, -1e+30
        %v1478 = vsel %vm1446, %v1374, -1e+30
        %v1479 = vsel %vm1447, %v1376, -1e+30
        %v1480 = vsel %vm1448, %v1378, -1e+30
        %v1481 = vmax.f32 %v1449, %v1450
        %1482 = vmax.xlane.f32.xlu0 %v1481
        %v1483 = vpop.xlane.xlu0 %1482
        %v1484 = vmax.f32 %v1451, %v1452
        %1485 = vmax.xlane.f32.xlu0 %v1484
        %v1486 = vpop.xlane.xlu0 %1485
        %v1487 = vmax.f32 %v1453, %v1454
        %1488 = vmax.xlane.f32.xlu0 %v1487
        %v1489 = vpop.xlane.xlu0 %1488
        %v1490 = vmax.f32 %v1455, %v1456
        %1491 = vmax.xlane.f32.xlu0 %v1490
        %v1492 = vpop.xlane.xlu0 %1491
        %v1493 = vmax.f32 %v1457, %v1458
        %1494 = vmax.xlane.f32.xlu0 %v1493
        %v1495 = vpop.xlane.xlu0 %1494
        %v1496 = vmax.f32 %v1459, %v1460
        %1497 = vmax.xlane.f32.xlu0 %v1496
        %v1498 = vpop.xlane.xlu0 %1497
        %v1499 = vmax.f32 %v1461, %v1462
        %1500 = vmax.xlane.f32.xlu0 %v1499
        %v1501 = vpop.xlane.xlu0 %1500
        %v1502 = vmax.f32 %v1463, %v1464
        %1503 = vmax.xlane.f32.xlu0 %v1502
        %v1504 = vpop.xlane.xlu0 %1503
        %v1505 = vmax.f32 %v1465, %v1466
        %1506 = vmax.xlane.f32.xlu0 %v1505
        %v1507 = vpop.xlane.xlu0 %1506
        %v1508 = vmax.f32 %v1467, %v1468
        %1509 = vmax.xlane.f32.xlu0 %v1508
        %v1510 = vpop.xlane.xlu0 %1509
        %v1511 = vmax.f32 %v1469, %v1470
        %1512 = vmax.xlane.f32.xlu0 %v1511
        %v1513 = vpop.xlane.xlu0 %1512
        %v1514 = vmax.f32 %v1471, %v1472
        %1515 = vmax.xlane.f32.xlu0 %v1514
        %v1516 = vpop.xlane.xlu0 %1515
        %v1517 = vmax.f32 %v1473, %v1474
        %1518 = vmax.xlane.f32.xlu0 %v1517
        %v1519 = vpop.xlane.xlu0 %1518
        %v1520 = vmax.f32 %v1475, %v1476
        %1521 = vmax.xlane.f32.xlu0 %v1520
        %v1522 = vpop.xlane.xlu0 %1521
        %v1523 = vmax.f32 %v1477, %v1478
        %1524 = vmax.xlane.f32.xlu0 %v1523
        %v1525 = vpop.xlane.xlu0 %1524
        %v1526 = vmax.f32 %v1479, %v1480
        %1527 = vmax.xlane.f32.xlu0 %v1526
        %v1528 = vpop.xlane.xlu0 %1527
        %v1529 = vsub.f32 %v1449, %v1483
        %v1530 = vsub.f32 %v1450, %v1483
        %v1531 = vsub.f32 %v1451, %v1486
        %v1532 = vsub.f32 %v1452, %v1486
        %v1533 = vsub.f32 %v1453, %v1489
        %v1534 = vsub.f32 %v1454, %v1489
        %v1535 = vsub.f32 %v1455, %v1492
        %v1536 = vsub.f32 %v1456, %v1492
        %v1537 = vsub.f32 %v1457, %v1495
        %v1538 = vsub.f32 %v1458, %v1495
        %v1539 = vsub.f32 %v1459, %v1498
        %v1540 = vsub.f32 %v1460, %v1498
        %v1541 = vsub.f32 %v1461, %v1501
        %v1542 = vsub.f32 %v1462, %v1501
        %v1543 = vsub.f32 %v1463, %v1504
        %v1544 = vsub.f32 %v1464, %v1504
        %v1545 = vsub.f32 %v1465, %v1507
        %v1546 = vsub.f32 %v1466, %v1507
        %v1547 = vsub.f32 %v1467, %v1510
        %v1548 = vsub.f32 %v1468, %v1510
        %v1549 = vsub.f32 %v1469, %v1513
        %v1550 = vsub.f32 %v1470, %v1513
        %v1551 = vsub.f32 %v1471, %v1516
        %v1552 = vsub.f32 %v1472, %v1516
        %v1553 = vsub.f32 %v1473, %v1519
        %v1554 = vsub.f32 %v1474, %v1519
        %v1555 = vsub.f32 %v1475, %v1522
        %v1556 = vsub.f32 %v1476, %v1522
        %v1557 = vsub.f32 %v1477, %v1525
        %v1558 = vsub.f32 %v1478, %v1525
        %v1559 = vsub.f32 %v1479, %v1528
        %v1560 = vsub.f32 %v1480, %v1528
        %v1561 = vmul.f32 %v1529, 1.442695
        %v1562 = vpow.pop %v1561
        %v1563 = vmul.f32 %v1530, 1.442695
        %v1564 = vpow.pop %v1563
        %v1565 = vmul.f32 %v1531, 1.442695
        %v1566 = vpow.pop %v1565
        %v1567 = vmul.f32 %v1532, 1.442695
        %v1568 = vpow.pop %v1567
        %v1569 = vmul.f32 %v1533, 1.442695
        %v1570 = vpow.pop %v1569
        %v1571 = vmul.f32 %v1534, 1.442695
        %v1572 = vpow.pop %v1571
        %v1573 = vmul.f32 %v1535, 1.442695
        %v1574 = vpow.pop %v1573
        %v1575 = vmul.f32 %v1536, 1.442695
        %v1576 = vpow.pop %v1575
        %v1577 = vmul.f32 %v1537, 1.442695
        %v1578 = vpow.pop %v1577
        %v1579 = vmul.f32 %v1538, 1.442695
        %v1580 = vpow.pop %v1579
        %v1581 = vmul.f32 %v1539, 1.442695
        %v1582 = vpow.pop %v1581
        %v1583 = vmul.f32 %v1540, 1.442695
        %v1584 = vpow.pop %v1583
        %v1585 = vmul.f32 %v1541, 1.442695
        %v1586 = vpow.pop %v1585
        %v1587 = vmul.f32 %v1542, 1.442695
        %v1588 = vpow.pop %v1587
        %v1589 = vmul.f32 %v1543, 1.442695
        %v1590 = vpow.pop %v1589
        %v1591 = vmul.f32 %v1544, 1.442695
        %v1592 = vpow.pop %v1591
        %v1593 = vmul.f32 %v1545, 1.442695
        %v1594 = vpow.pop %v1593
        %v1595 = vmul.f32 %v1546, 1.442695
        %v1596 = vpow.pop %v1595
        %v1597 = vmul.f32 %v1547, 1.442695
        %v1598 = vpow.pop %v1597
        %v1599 = vmul.f32 %v1548, 1.442695
        %v1600 = vpow.pop %v1599
        %v1601 = vmul.f32 %v1549, 1.442695
        %v1602 = vpow.pop %v1601
        %v1603 = vmul.f32 %v1550, 1.442695
        %v1604 = vpow.pop %v1603
        %v1605 = vmul.f32 %v1551, 1.442695
        %v1606 = vpow.pop %v1605
        %v1607 = vmul.f32 %v1552, 1.442695
        %v1608 = vpow.pop %v1607
        %v1609 = vmul.f32 %v1553, 1.442695
        %v1610 = vpow.pop %v1609
        %v1611 = vmul.f32 %v1554, 1.442695
        %v1612 = vpow.pop %v1611
        %v1613 = vmul.f32 %v1555, 1.442695
        %v1614 = vpow.pop %v1613
        %v1615 = vmul.f32 %v1556, 1.442695
        %v1616 = vpow.pop %v1615
        %v1617 = vmul.f32 %v1557, 1.442695
        %v1618 = vpow.pop %v1617
        %v1619 = vmul.f32 %v1558, 1.442695
        %v1620 = vpow.pop %v1619
        %v1621 = vmul.f32 %v1559, 1.442695
        %v1622 = vpow.pop %v1621
        %v1623 = vmul.f32 %v1560, 1.442695
        %v1624 = vpow.pop %v1623
        %v1625 = vadd.f32 %v1562, %v1564
        %1626 = vadd.xlane.f32.xlu0 %v1625
        %v1627 = vpop.xlane.xlu0 %1626
        %v1628 = vadd.f32 %v1566, %v1568
        %1629 = vadd.xlane.f32.xlu0 %v1628
        %v1630 = vpop.xlane.xlu0 %1629
        %v1631 = vadd.f32 %v1570, %v1572
        %1632 = vadd.xlane.f32.xlu0 %v1631
        %v1633 = vpop.xlane.xlu0 %1632
        %v1634 = vadd.f32 %v1574, %v1576
        %1635 = vadd.xlane.f32.xlu0 %v1634
        %v1636 = vpop.xlane.xlu0 %1635
        %v1637 = vadd.f32 %v1578, %v1580
        %1638 = vadd.xlane.f32.xlu0 %v1637
        %v1639 = vpop.xlane.xlu0 %1638
        %v1640 = vadd.f32 %v1582, %v1584
        %1641 = vadd.xlane.f32.xlu0 %v1640
        %v1642 = vpop.xlane.xlu0 %1641
        %v1643 = vadd.f32 %v1586, %v1588
        %1644 = vadd.xlane.f32.xlu0 %v1643
        %v1645 = vpop.xlane.xlu0 %1644
        %v1646 = vadd.f32 %v1590, %v1592
        %1647 = vadd.xlane.f32.xlu0 %v1646
        %v1648 = vpop.xlane.xlu0 %1647
        %v1649 = vadd.f32 %v1594, %v1596
        %1650 = vadd.xlane.f32.xlu0 %v1649
        %v1651 = vpop.xlane.xlu0 %1650
        %v1652 = vadd.f32 %v1598, %v1600
        %1653 = vadd.xlane.f32.xlu0 %v1652
        %v1654 = vpop.xlane.xlu0 %1653
        %v1655 = vadd.f32 %v1602, %v1604
        %1656 = vadd.xlane.f32.xlu0 %v1655
        %v1657 = vpop.xlane.xlu0 %1656
        %v1658 = vadd.f32 %v1606, %v1608
        %1659 = vadd.xlane.f32.xlu0 %v1658
        %v1660 = vpop.xlane.xlu0 %1659
        %v1661 = vadd.f32 %v1610, %v1612
        %1662 = vadd.xlane.f32.xlu0 %v1661
        %v1663 = vpop.xlane.xlu0 %1662
        %v1664 = vadd.f32 %v1614, %v1616
        %1665 = vadd.xlane.f32.xlu0 %v1664
        %v1666 = vpop.xlane.xlu0 %1665
        %v1667 = vadd.f32 %v1618, %v1620
        %1668 = vadd.xlane.f32.xlu0 %v1667
        %v1669 = vpop.xlane.xlu0 %1668
        %v1670 = vadd.f32 %v1622, %v1624
        %1671 = vadd.xlane.f32.xlu0 %v1670
        %v1672 = vpop.xlane.xlu0 %1671
        %v1673 = vrcp.pop %v1627
        %v1674 = vrcp.pop %v1630
        %v1675 = vrcp.pop %v1633
        %v1676 = vrcp.pop %v1636
        %v1677 = vrcp.pop %v1639
        %v1678 = vrcp.pop %v1642
        %v1679 = vrcp.pop %v1645
        %v1680 = vrcp.pop %v1648
        %v1681 = vrcp.pop %v1651
        %v1682 = vrcp.pop %v1654
        %v1683 = vrcp.pop %v1657
        %v1684 = vrcp.pop %v1660
        %v1685 = vrcp.pop %v1663
        %v1686 = vrcp.pop %v1666
        %v1687 = vrcp.pop %v1669
        %v1688 = vrcp.pop %v1672
        %v1689 = vmul.f32 %v1627, %v1673
        %v1690 = vmul.f32 %v1630, %v1674
        %v1691 = vmul.f32 %v1633, %v1675
        %v1692 = vmul.f32 %v1636, %v1676
        %v1693 = vmul.f32 %v1639, %v1677
        %v1694 = vmul.f32 %v1642, %v1678
        %v1695 = vmul.f32 %v1645, %v1679
        %v1696 = vmul.f32 %v1648, %v1680
        %v1697 = vmul.f32 %v1651, %v1681
        %v1698 = vmul.f32 %v1654, %v1682
        %v1699 = vmul.f32 %v1657, %v1683
        %v1700 = vmul.f32 %v1660, %v1684
        %v1701 = vmul.f32 %v1663, %v1685
        %v1702 = vmul.f32 %v1666, %v1686
        %v1703 = vmul.f32 %v1669, %v1687
        %v1704 = vmul.f32 %v1672, %v1688
        %v1705 = vsub.f32 2.0, %v1689
        %v1706 = vsub.f32 2.0, %v1690
        %v1707 = vsub.f32 2.0, %v1691
        %v1708 = vsub.f32 2.0, %v1692
        %v1709 = vsub.f32 2.0, %v1693
        %v1710 = vsub.f32 2.0, %v1694
        %v1711 = vsub.f32 2.0, %v1695
        %v1712 = vsub.f32 2.0, %v1696
        %v1713 = vsub.f32 2.0, %v1697
        %v1714 = vsub.f32 2.0, %v1698
        %v1715 = vsub.f32 2.0, %v1699
        %v1716 = vsub.f32 2.0, %v1700
        %v1717 = vsub.f32 2.0, %v1701
        %v1718 = vsub.f32 2.0, %v1702
        %v1719 = vsub.f32 2.0, %v1703
        %v1720 = vsub.f32 2.0, %v1704
        %v1721 = vmul.f32 %v1673, %v1705
        %v1722 = vmul.f32 %v1674, %v1706
        %v1723 = vmul.f32 %v1675, %v1707
        %v1724 = vmul.f32 %v1676, %v1708
        %v1725 = vmul.f32 %v1677, %v1709
        %v1726 = vmul.f32 %v1678, %v1710
        %v1727 = vmul.f32 %v1679, %v1711
        %v1728 = vmul.f32 %v1680, %v1712
        %v1729 = vmul.f32 %v1681, %v1713
        %v1730 = vmul.f32 %v1682, %v1714
        %v1731 = vmul.f32 %v1683, %v1715
        %v1732 = vmul.f32 %v1684, %v1716
        %v1733 = vmul.f32 %v1685, %v1717
        %v1734 = vmul.f32 %v1686, %v1718
        %v1735 = vmul.f32 %v1687, %v1719
        %v1736 = vmul.f32 %v1688, %v1720
        %v1737 = vpack.c.bf16 %v1566, %v1562
        %v1738 = vpack.c.bf16 %v1568, %v1564
        %v1739 = vpack.c.bf16 %v1574, %v1570
        %v1740 = vpack.c.bf16 %v1576, %v1572
        %v1741 = vpack.c.bf16 %v1582, %v1578
        %v1742 = vpack.c.bf16 %v1584, %v1580
        %v1743 = vpack.c.bf16 %v1590, %v1586
        %v1744 = vpack.c.bf16 %v1592, %v1588
        %v1745 = vpack.c.bf16 %v1598, %v1594
        %v1746 = vpack.c.bf16 %v1600, %v1596
        %v1747 = vpack.c.bf16 %v1606, %v1602
        %v1748 = vpack.c.bf16 %v1608, %v1604
        %v1749 = vpack.c.bf16 %v1614, %v1610
        %v1750 = vpack.c.bf16 %v1616, %v1612
        %v1751 = vpack.c.bf16 %v1622, %v1618
        %v1752 = vpack.c.bf16 %v1624, %v1620
        %1753 = vmatprep.subr.bf16.mxu0 0
        %1754 = vmatpush1.bf16.msra.mxu0 %v940
        %1755 = vmatprep.subr.bf16.mxu0 0
        %1756 = vmatpush1.bf16.msra.mxu0 %v942
        %1757 = vmatprep.subr.bf16.mxu0 0
        %1758 = vmatpush1.bf16.msra.mxu0 %v944
        %1759 = vmatprep.subr.bf16.mxu0 0
        %1760 = vmatpush1.bf16.msra.mxu0 %v946
        %1761 = vmatprep.subr.bf16.mxu0 0
        %1762 = vmatpush1.bf16.msra.mxu0 %v948
        %1763 = vmatprep.subr.bf16.mxu0 0
        %1764 = vmatpush1.bf16.msra.mxu0 %v950
        %1765 = vmatprep.subr.bf16.mxu0 0
        %1766 = vmatpush1.bf16.msra.mxu0 %v952
        %1767 = vmatprep.subr.bf16.mxu0 0
        %1768 = vmatpush1.bf16.msra.mxu0 %v954
        %1769 = vmatprep.subr.bf16.mxu0 0
        %1770 = vmatpush1.bf16.msra.mxu0 %v956
        %1771 = vmatprep.subr.bf16.mxu0 0
        %1772 = vmatpush1.bf16.msra.mxu0 %v958
        %1773 = vmatprep.subr.bf16.mxu0 0
        %1774 = vmatpush1.bf16.msra.mxu0 %v960
        %1775 = vmatprep.subr.bf16.mxu0 0
        %1776 = vmatpush1.bf16.msra.mxu0 %v962
        %1777 = vmatprep.subr.bf16.mxu0 0
        %1778 = vmatpush1.bf16.msra.mxu0 %v964
        %1779 = vmatprep.subr.bf16.mxu0 0
        %1780 = vmatpush1.bf16.msra.mxu0 %v966
        %1781 = vmatprep.subr.bf16.mxu0 0
        %1782 = vmatpush1.bf16.msra.mxu0 %v968
        %1783 = vmatprep.subr.bf16.mxu0 0
        %1784 = vmatpush1.bf16.msra.mxu0 %v970
        %1785 = vmatprep.mubr.bf16.mxu0 %v1738
        %1786 = vmatmul.mubr.bf16.gmra.mrb[0].mxu0 %v1737
        %v1787 = vpop.f32.mrb[0].mxu0
        %v1788 = vadd.f32 0.0, %v1787
        %v1789 = vpop.f32.mrb[0].mxu0
        %v1790 = vpop.f32.mrb[0].mxu0
        %v1791 = vadd.f32 0.0, %v1790
        %v1792 = vpop.f32.mrb[0].mxu0
        %1793 = vmatprep.mubr.bf16.mxu0 %v1740
        %1794 = vmatmul.mubr.bf16.gmra.mrb[0].mxu0 %v1739
        %v1795 = vpop.f32.mrb[0].mxu0
        %v1796 = vadd.f32 0.0, %v1795
        %v1797 = vpop.f32.mrb[0].mxu0
        %v1798 = vpop.f32.mrb[0].mxu0
        %v1799 = vadd.f32 0.0, %v1798
        %v1800 = vpop.f32.mrb[0].mxu0
        %1801 = vmatprep.mubr.bf16.mxu0 %v1742
        %1802 = vmatmul.mubr.bf16.gmra.mrb[0].mxu0 %v1741
        %v1803 = vpop.f32.mrb[0].mxu0
        %v1804 = vadd.f32 0.0, %v1803
        %v1805 = vpop.f32.mrb[0].mxu0
        %v1806 = vpop.f32.mrb[0].mxu0
        %v1807 = vadd.f32 0.0, %v1806
        %v1808 = vpop.f32.mrb[0].mxu0
        %1809 = vmatprep.mubr.bf16.mxu0 %v1744
        %1810 = vmatmul.mubr.bf16.gmra.mrb[0].mxu0 %v1743
        %v1811 = vpop.f32.mrb[0].mxu0
        %v1812 = vadd.f32 0.0, %v1811
        %v1813 = vpop.f32.mrb[0].mxu0
        %v1814 = vpop.f32.mrb[0].mxu0
        %v1815 = vadd.f32 0.0, %v1814
        %v1816 = vpop.f32.mrb[0].mxu0
        %1817 = vmatprep.mubr.bf16.mxu0 %v1746
        %1818 = vmatmul.mubr.bf16.gmra.mrb[0].mxu0 %v1745
        %v1819 = vpop.f32.mrb[0].mxu0
        %v1820 = vadd.f32 0.0, %v1819
        %v1821 = vpop.f32.mrb[0].mxu0
        %v1822 = vpop.f32.mrb[0].mxu0
        %v1823 = vadd.f32 0.0, %v1822
        %v1824 = vpop.f32.mrb[0].mxu0
        %1825 = vmatprep.mubr.bf16.mxu0 %v1748
        %1826 = vmatmul.mubr.bf16.gmra.mrb[0].mxu0 %v1747
        %v1827 = vpop.f32.mrb[0].mxu0
        %v1828 = vadd.f32 0.0, %v1827
        %v1829 = vpop.f32.mrb[0].mxu0
        %v1830 = vpop.f32.mrb[0].mxu0
        %v1831 = vadd.f32 0.0, %v1830
        %v1832 = vpop.f32.mrb[0].mxu0
        %1833 = vmatprep.mubr.bf16.mxu0 %v1750
        %1834 = vmatmul.mubr.bf16.gmra.mrb[0].mxu0 %v1749
        %v1835 = vpop.f32.mrb[0].mxu0
        %v1836 = vadd.f32 0.0, %v1835
        %v1837 = vpop.f32.mrb[0].mxu0
        %v1838 = vpop.f32.mrb[0].mxu0
        %v1839 = vadd.f32 0.0, %v1838
        %v1840 = vpop.f32.mrb[0].mxu0
        %1841 = vmatprep.mubr.bf16.mxu0 %v1752
        %1842 = vmatmul.mubr.bf16.gmra.mrb[0].mxu0 %v1751
        %v1843 = vpop.f32.mrb[0].mxu0
        %v1844 = vadd.f32 0.0, %v1843
        %v1845 = vpop.f32.mrb[0].mxu0
        %v1846 = vpop.f32.mrb[0].mxu0
        %v1847 = vadd.f32 0.0, %v1846
        %v1848 = vpop.f32.mrb[0].mxu0
        %1849 = vdwg.mxu0
        %v1850 = vmul.f32 %v1788, %v1721
        %v1851 = vmul.f32 %v1791, %v1722
        %v1852 = vmul.f32 %v1796, %v1723
        %v1853 = vmul.f32 %v1799, %v1724
        %v1854 = vmul.f32 %v1804, %v1725
        %v1855 = vmul.f32 %v1807, %v1726
        %v1856 = vmul.f32 %v1812, %v1727
        %v1857 = vmul.f32 %v1815, %v1728
        %v1858 = vmul.f32 %v1820, %v1729
        %v1859 = vmul.f32 %v1823, %v1730
        %v1860 = vmul.f32 %v1828, %v1731
        %v1861 = vmul.f32 %v1831, %v1732
        %v1862 = vmul.f32 %v1836, %v1733
        %v1863 = vmul.f32 %v1839, %v1734
        %v1864 = vmul.f32 %v1844, %v1735
        %v1865 = vmul.f32 %v1847, %v1736
        %1866 = vst [vmem:[%s190] sm:$0xff] %v1850
        %1867 = vst [vmem:[%s190 + $0x8] sm:$0xff] %v1851
        %1868 = vst [vmem:[%s190 + $0x10] sm:$0xff] %v1852
        %1869 = vst [vmem:[%s190 + $0x18] sm:$0xff] %v1853
        %1870 = vst [vmem:[%s190 + $0x20] sm:$0xff] %v1854
        %1871 = vst [vmem:[%s190 + $0x28] sm:$0xff] %v1855
        %1872 = vst [vmem:[%s190 + $0x30] sm:$0xff] %v1856
        %1873 = vst [vmem:[%s190 + $0x38] sm:$0xff] %v1857
        %1874 = vst [vmem:[%s190 + $0x40] sm:$0xff] %v1858
        %1875 = vst [vmem:[%s190 + $0x48] sm:$0xff] %v1859
        %1876 = vst [vmem:[%s190 + $0x50] sm:$0xff] %v1860
        %1877 = vst [vmem:[%s190 + $0x58] sm:$0xff] %v1861
        %1878 = vst [vmem:[%s190 + $0x60] sm:$0xff] %v1862
        %1879 = vst [vmem:[%s190 + $0x68] sm:$0xff] %v1863
        %1880 = vst [vmem:[%s190 + $0x70] sm:$0xff] %v1864
        %1881 = vst [vmem:[%s190 + $0x78] sm:$0xff] %v1865
        %s1882 = sand.u32 %s89, 1
        %s1883 = scalar_lea.sflag [#allocation4], %s1882
        %s1884 = sand.u32 %s89, 1
        %s1885 = smul.addr %s1884, 128
        %s1886 = scalar_lea.vmem [#allocation7], %s1885
        // Predicated region
        $region37: #{tpu_custom_call.1} parent=27 // pred_check
          %p1887 = pneg %p99
        $region38: #{tpu_custom_call.1} parent=27 // pred_check_branch
          %1889 = sbr.rel (%p1887) target = $region40
        $region39: #{tpu_custom_call.1} parent=27 // pred_region
          %s1890 = smul.u32 16, %s25
          %s1892 = ssub.s32 2048, 2048
          %1893 = vsyncadd %s1883, %s1892
          %s1894 = smul.addr %s24, 32
          %s1895 = sadd.s32 %s1890, %s1894
          %s1896 = smul.addr %s1895, 128
          %s1897 = scalar_lea.hbm %s2, %s1896
          %s1898 = sshll.u32 %s1886, 4
          %s1899 = int_to_ptr.vmem [resolvable:$true] %s1898
          %1904 = dma.vmem_to_hbm [thread:$0]  %s1899, 2048, %s1897, %s1883, 128, 128, 8
        $region40: #{tpu_custom_call.1} parent=27 // pred_fallthru
          _
      $region28: #{tpu_custom_call.1} parent=5 // pred_fallthru
        _
      %p1905 = scmp.le.s32.totalorder 2, %s15
      // Predicated region
      $region41: #{tpu_custom_call.1} parent=5 // pred_check
        %p1906 = pneg %p1905
      $region42: #{tpu_custom_call.1} parent=5 // pred_check_branch
        %1908 = sbr.rel (%p1906) target = $region44
      $region43: #{tpu_custom_call.1} parent=5 // pred_region
        %s1909 = ssub.s32 %s15, 2
        // Predicated region
        $region45: #{tpu_custom_call.1} parent=43 // pred_check
          %p1910 = pneg %p105
        $region46: #{tpu_custom_call.1} parent=43 // pred_check_branch
          %1912 = sbr.rel (%p1910) target = $region48
        $region47: #{tpu_custom_call.1} parent=43 // pred_region
          %s1913 = sand.u32 %s90, 1
          %s1914 = scalar_lea.sflag [#allocation4], %s1913
          %s1915 = sand.u32 %s90, 1
          %s1916 = smul.addr %s1915, 128
          %s1917 = scalar_lea.vmem [#allocation7], %s1916
          %1918 = dma.done %s1914, 2048
        $region48: #{tpu_custom_call.1} parent=43 // pred_fallthru
          _
      $region44: #{tpu_custom_call.1} parent=5 // pred_fallthru
        _
    $region6: #{tpu_custom_call.1} parent=1 // loop_footer
      %s19 = sadd.s32 1, %s15
    $region7: #{tpu_custom_call.1} parent=1 // loop_footer_branch
      %14 = sbr.rel target = $region3
    $region8: #{tpu_custom_call.1} parent=1 // loop_exit
      _
    %1919 = vsyncpa [#allocation3], 1
    %s1920 = scalar_lea.sflag [#allocation3], 1
    %1921 = vsyncpa %s1920, 1
    %1922 = vsyncpa [#allocation6], 1
    %1923 = vsyncpa [#allocation4], 1
    %s1924 = scalar_lea.sflag [#allocation4], 1
    %1925 = vsyncpa %s1924, 1

</llo_original>
